<compile_context>
chip_gen: v5e
topology: v5e:2x2
jax: 0.10.0
libtpu: 0.0.40
codegen_flags: <defaults>
</compile_context>

<pallas_src>
import numpy as np

import jax
import jax.numpy as jnp
from jax.experimental import pallas as pl
from jax.experimental.pallas import tpu as pltpu


# ----------------------------------------------------------------------------
# helpers
# ----------------------------------------------------------------------------
def _shift(x, dr, dc):
    """result[i, j] = x[(i + dr) % R, (j + dc) % C] for static dr, dc."""
    r, c = x.shape
    dr %= r
    dc %= c
    if dr:
        x = jnp.concatenate([x[dr:, :], x[:dr, :]], axis=0)
    if dc:
        x = jnp.concatenate([x[:, dc:], x[:, :dc]], axis=1)
    return x


def _selection_matrices():
    """0/1 matrices for pool-downsample / unpool-upsample (built once)."""
    sr = np.zeros((15, 30), np.float32)     # pooled row selector
    sct = np.zeros((30, 15), np.float32)    # pooled col selector (transposed)
    for p in range(15):
        sr[p, max(2 * p - 1, 0)] = 1.0
        sct[max(2 * p - 1, 0), p] = 1.0
    ur = np.zeros((30, 15), np.float32)     # unpool row broadcaster
    uct = np.zeros((15, 30), np.float32)    # unpool col broadcaster (transposed)
    for h in range(28):
        ur[h, (h + 1) // 2] = 1.0
        uct[(h + 1) // 2, h] = 1.0
    return sr, sct, ur, uct


# ----------------------------------------------------------------------------
# the fused kernel
# ----------------------------------------------------------------------------
def _pixel_encoder_kernel(x_ref, scal_ref, sr_ref, sct_ref, we_ref, be_ref,
                          wd_ref, bd_ref, ur_ref, uct_ref, o_ref):
    f32 = jnp.float32
    x = x_ref[...]                                            # (30, 30)

    # ---- Conv2d(1, 1, 3, stride=1, padding=0); valid on [0:28, 0:28] ----
    conv = jnp.zeros((30, 30), f32)
    for di in range(3):
        for dj in range(3):
            conv = conv + _shift(x, di, dj) * scal_ref[3 * di + dj]
    conv = conv + scal_ref[9]

    row = jax.lax.broadcasted_iota(jnp.int32, (30, 30), 0)
    col = jax.lax.broadcasted_iota(jnp.int32, (30, 30), 1)
    valid = (row < 28) & (col < 28)
    h_odd = (row % 2) == 1
    w_odd = (col % 2) == 1

    cm = jnp.where(valid, conv, -1e30)                        # -inf-style pool padding

    # ---- MaxPool2d(2, 2, padding=1): window partners (exact copies) ----
    up, dn = _shift(cm, -1, 0), _shift(cm, 1, 0)
    lf, rt = _shift(cm, 0, -1), _shift(cm, 0, 1)
    c_ul, c_ur = _shift(cm, -1, -1), _shift(cm, -1, 1)
    c_dl, c_dr = _shift(cm, 1, -1), _shift(cm, 1, 1)

    r_p = jnp.where(h_odd, dn, up)                            # row partner
    c_p = jnp.where(w_odd, rt, lf)                            # col partner
    d_p = jnp.where(h_odd, jnp.where(w_odd, c_dr, c_dl),
                    jnp.where(w_odd, c_ur, c_ul))             # diagonal partner

    win_max = jnp.maximum(jnp.maximum(cm, r_p), jnp.maximum(c_p, d_p))

    # PyTorch keeps the FIRST maximal element in window scan order:
    # earlier members must be beaten strictly, later members only tied.
    cond_r = (cm > r_p) | (h_odd & (cm == r_p))
    cond_d = (cm > d_p) | (h_odd & (cm == d_p))
    cond_c = (cm > c_p) | (w_odd & (cm == c_p))
    chosen = cond_r & cond_d & cond_c & valid

    # ---- pooled (15, 15): selection matmuls on the MXU ----
    pooled = jnp.dot(jnp.dot(sr_ref[...], win_max, preferred_element_type=f32),
                     sct_ref[...], preferred_element_type=f32)

    # ---- encoder: Linear(225 -> 50) on the row-major flatten of pooled ----
    enc = be_ref[...]                                         # (1, 50)
    for p in range(15):
        enc = enc + jnp.dot(pooled[p:p + 1, :], we_ref[p],
                            preferred_element_type=f32)

    # ---- decoder: Linear(50 -> 225), rebuilt directly as a (15, 15) map ----
    rows = [jnp.dot(enc, wd_ref[p], preferred_element_type=f32)   # (1, 15)
            for p in range(15)]
    dec2d = jnp.concatenate(rows, axis=0) + bd_ref[...]           # (15, 15)

    # ---- MaxUnpool2d(2, 2, padding=1): masked broadcast of decoded values ----
    dup = jnp.dot(jnp.dot(ur_ref[...], dec2d, preferred_element_type=f32),
                  uct_ref[...], preferred_element_type=f32)       # (30, 30)
    unpooled = jnp.where(chosen, dup, 0.0)                        # zero off-argmax

    # ---- ConvTranspose2d(1, 1, 3, stride=1, padding=0): output 30x30 ----
    out = jnp.zeros((30, 30), f32)
    for di in range(3):
        for dj in range(3):
            out = out + _shift(unpooled, -di, -dj) * scal_ref[10 + 3 * di + dj]
    o_ref[...] = out + scal_ref[19]


# ----------------------------------------------------------------------------
# wrapper
# ----------------------------------------------------------------------------
def pixel_encoder_forward(x, prep):
    """x: (1, 1, 30, 30) float32 (NCHW). Returns (1, 1, 30, 30)."""
    x2d = x.reshape(30, 30).astype(jnp.float32)
    out = pl.pallas_call(
        _pixel_encoder_kernel,
        out_shape=jax.ShapeDtypeStruct((30, 30), jnp.float32),
        in_specs=[
            pl.BlockSpec((30, 30), lambda: (0, 0)),                  # image
            pl.BlockSpec(memory_space=pltpu.MemorySpace.SMEM),       # conv scalars
            pl.BlockSpec((15, 30), lambda: (0, 0)),                  # sr
            pl.BlockSpec((30, 15), lambda: (0, 0)),                  # sct
            pl.BlockSpec((15, 15, 50), lambda: (0, 0, 0)),           # enc_w_r
            pl.BlockSpec((1, 50), lambda: (0, 0)),                   # enc_b
            pl.BlockSpec((15, 50, 15), lambda: (0, 0, 0)),           # dec_w_r
            pl.BlockSpec((15, 15), lambda: (0, 0)),                  # dec_b2
            pl.BlockSpec((30, 15), lambda: (0, 0)),                  # ur
            pl.BlockSpec((15, 30), lambda: (0, 0)),                  # uct
        ],
        out_specs=pl.BlockSpec((30, 30), lambda: (0, 0)),
    )(x2d, prep["scalars"], prep["sr"], prep["sct"], prep["enc_w_r"],
      prep["enc_b"], prep["dec_w_r"], prep["dec_b2"], prep["ur"], prep["uct"])
    return out.reshape(1, 1, 30, 30)


def init_params(key):
    ks = jax.random.split(key, 8)

    def u(k, shape, fan_in):
        s = float(fan_in) ** -0.5
        return jax.random.uniform(k, shape, jnp.float32, -s, s)

    return {
        "conv_w": u(ks[0], (1, 1, 3, 3), 9),
        "conv_b": u(ks[1], (1,), 9),
        "enc_w": u(ks[2], (50, 225), 225),
        "enc_b": u(ks[3], (50,), 225),
        "dec_w": u(ks[4], (225, 50), 50),
        "dec_b": u(ks[5], (225,), 50),
        "tconv_w": u(ks[6], (1, 1, 3, 3), 9),
        "tconv_b": u(ks[7], (1,), 9),
    }


def prepare_params(params):
    """Hoist every weight reshape/transpose out of the hot path (done once)."""
    sr, sct, ur, uct = _selection_matrices()
    enc_w_r = jnp.transpose(params["enc_w"].reshape(50, 15, 15), (1, 2, 0))
    dec_w_r = jnp.transpose(params["dec_w"].reshape(15, 15, 50), (0, 2, 1))
    scalars = jnp.concatenate([
        params["conv_w"].reshape(-1), params["conv_b"].reshape(-1),
        params["tconv_w"].reshape(-1), params["tconv_b"].reshape(-1),
    ]).astype(jnp.float32)                                    # (20,)
    return {
        "scalars": scalars,
        "sr": jnp.asarray(sr), "sct": jnp.asarray(sct),
        "ur": jnp.asarray(ur), "uct": jnp.asarray(uct),
        "enc_w_r": enc_w_r.astype(jnp.float32),
        "enc_b": params["enc_b"].reshape(1, 50).astype(jnp.float32),
        "dec_w_r": dec_w_r.astype(jnp.float32),
        "dec_b2": params["dec_b"].reshape(15, 15).astype(jnp.float32),
    }


# ----------------------------------------------------------------------------
# NumPy reference of the exact PyTorch semantics (for self-check)
# ----------------------------------------------------------------------------
def _reference_forward(x_np, p_np):
    x = x_np.astype(np.float64)[0, 0]
    wc = p_np["conv_w"].astype(np.float64).reshape(3, 3)
    bc = float(p_np["conv_b"][0])
    conv = np.zeros((28, 28))
    for i in range(28):
        for j in range(28):
            conv[i, j] = np.sum(x[i:i + 3, j:j + 3] * wc) + bc
    pooled = np.zeros((15, 15))
    argidx = np.zeros((15, 15), np.int64)
    for p in range(15):
        for q in range(15):
            best, besti = -np.inf, -1
            for a in range(2):
                for b in range(2):
                    h, w = 2 * p - 1 + a, 2 * q - 1 + b
                    if 0 <= h < 28 and 0 <= w < 28 and conv[h, w] > best:
                        best, besti = conv[h, w], h * 28 + w
            pooled[p, q], argidx[p, q] = best, besti
    we, be = p_np["enc_w"].astype(np.float64), p_np["enc_b"].astype(np.float64)
    wd, bd = p_np["dec_w"].astype(np.float64), p_np["dec_b"].astype(np.float64)
    enc = pooled.reshape(1, 225) @ we.T + be
    dec = (enc @ wd.T + bd).reshape(15, 15)
    unpooled = np.zeros(28 * 28)
    for p in range(15):
        for q in range(15):
            unpooled[argidx[p, q]] = dec[p, q]
    unpooled = unpooled.reshape(28, 28)
    wt = p_np["tconv_w"].astype(np.float64).reshape(3, 3)
    bt = float(p_np["tconv_b"][0])
    out = np.full((30, 30), bt)
    for i in range(28):
        for j in range(28):
            out[i:i + 3, j:j + 3] += unpooled[i, j] * wt
    return out


if __name__ == "__main__":
    key = jax.random.PRNGKey(0)
    kx, kp = jax.random.split(key)
    x = jax.random.normal(kx, (1, 1, 30, 30), dtype=jnp.float32)
    params = init_params(kp)
    prep = prepare_params(params)

    fwd = jax.jit(pixel_encoder_forward)
    out = jax.block_until_ready(fwd(x, prep))
    assert out.shape == (1, 1, 30, 30), out.shape

    ref = _reference_forward(np.asarray(x),
                             jax.tree_util.tree_map(np.asarray, params))
    np.testing.assert_allclose(np.asarray(out)[0, 0], ref, rtol=5e-2, atol=5e-2)
    print("KERNEL_OK")
</pallas_src>

<mosaic_0001>
module attributes {stable_mosaic.version = 11 : i64} {
  func.func @_pixel_encoder_kernel(%arg0: memref<30x30xf32, #tpu.memory_space<vmem>>, %arg1: memref<20xf32, #tpu.memory_space<smem>>, %arg2: memref<15x30xf32, #tpu.memory_space<vmem>>, %arg3: memref<30x15xf32, #tpu.memory_space<vmem>>, %arg4: memref<15x15x50xf32, #tpu.memory_space<vmem>>, %arg5: memref<1x50xf32, #tpu.memory_space<vmem>>, %arg6: memref<15x50x15xf32, #tpu.memory_space<vmem>>, %arg7: memref<15x15xf32, #tpu.memory_space<vmem>>, %arg8: memref<30x15xf32, #tpu.memory_space<vmem>>, %arg9: memref<15x30xf32, #tpu.memory_space<vmem>>, %arg10: memref<30x30xf32, #tpu.memory_space<vmem>>) attributes {dimension_semantics = [], scalar_prefetch = 0 : i64, scratch_operands = 0 : i64, tpu.core_type = #tpu.core_type<tc>} {
    %c0 = arith.constant 0 : index
    %c0_0 = arith.constant 0 : index
    %0 = vector.load %arg0[%c0, %c0_0] : memref<30x30xf32, #tpu.memory_space<vmem>>, vector<30x30xf32>
    %cst = arith.constant 0.000000e+00 : f32
    %1 = vector.broadcast %cst : f32 to vector<30x30xf32>
    %c0_1 = arith.constant 0 : index
    %2 = memref.load %arg1[%c0_1] : memref<20xf32, #tpu.memory_space<smem>>
    %3 = vector.broadcast %2 : f32 to vector<30x30xf32>
    %4 = arith.mulf %0, %3 : vector<30x30xf32>
    %5 = arith.addf %1, %4 : vector<30x30xf32>
    %6 = vector.extract_strided_slice %0 {offsets = [0, 1], sizes = [30, 29], strides = [1, 1]} : vector<30x30xf32> to vector<30x29xf32>
    %7 = vector.extract_strided_slice %0 {offsets = [0, 0], sizes = [30, 1], strides = [1, 1]} : vector<30x30xf32> to vector<30x1xf32>
    %8 = tpu.concatenate %6, %7 in 1 : vector<30x29xf32>, vector<30x1xf32> -> vector<30x30xf32>
    %c1 = arith.constant 1 : index
    %9 = memref.load %arg1[%c1] : memref<20xf32, #tpu.memory_space<smem>>
    %10 = vector.broadcast %9 : f32 to vector<30x30xf32>
    %11 = arith.mulf %8, %10 : vector<30x30xf32>
    %12 = arith.addf %5, %11 : vector<30x30xf32>
    %13 = vector.extract_strided_slice %0 {offsets = [0, 2], sizes = [30, 28], strides = [1, 1]} : vector<30x30xf32> to vector<30x28xf32>
    %14 = vector.extract_strided_slice %0 {offsets = [0, 0], sizes = [30, 2], strides = [1, 1]} : vector<30x30xf32> to vector<30x2xf32>
    %15 = tpu.concatenate %13, %14 in 1 : vector<30x28xf32>, vector<30x2xf32> -> vector<30x30xf32>
    %c2 = arith.constant 2 : index
    %16 = memref.load %arg1[%c2] : memref<20xf32, #tpu.memory_space<smem>>
    %17 = vector.broadcast %16 : f32 to vector<30x30xf32>
    %18 = arith.mulf %15, %17 : vector<30x30xf32>
    %19 = arith.addf %12, %18 : vector<30x30xf32>
    %20 = vector.extract_strided_slice %0 {offsets = [1, 0], sizes = [29, 30], strides = [1, 1]} : vector<30x30xf32> to vector<29x30xf32>
    %21 = vector.extract_strided_slice %0 {offsets = [0, 0], sizes = [1, 30], strides = [1, 1]} : vector<30x30xf32> to vector<1x30xf32>
    %22 = tpu.concatenate %20, %21 in 0 : vector<29x30xf32>, vector<1x30xf32> -> vector<30x30xf32>
    %c3 = arith.constant 3 : index
    %23 = memref.load %arg1[%c3] : memref<20xf32, #tpu.memory_space<smem>>
    %24 = vector.broadcast %23 : f32 to vector<30x30xf32>
    %25 = arith.mulf %22, %24 : vector<30x30xf32>
    %26 = arith.addf %19, %25 : vector<30x30xf32>
    %27 = vector.extract_strided_slice %0 {offsets = [1, 0], sizes = [29, 30], strides = [1, 1]} : vector<30x30xf32> to vector<29x30xf32>
    %28 = vector.extract_strided_slice %0 {offsets = [0, 0], sizes = [1, 30], strides = [1, 1]} : vector<30x30xf32> to vector<1x30xf32>
    %29 = tpu.concatenate %27, %28 in 0 : vector<29x30xf32>, vector<1x30xf32> -> vector<30x30xf32>
    %30 = vector.extract_strided_slice %29 {offsets = [0, 1], sizes = [30, 29], strides = [1, 1]} : vector<30x30xf32> to vector<30x29xf32>
    %31 = vector.extract_strided_slice %29 {offsets = [0, 0], sizes = [30, 1], strides = [1, 1]} : vector<30x30xf32> to vector<30x1xf32>
    %32 = tpu.concatenate %30, %31 in 1 : vector<30x29xf32>, vector<30x1xf32> -> vector<30x30xf32>
    %c4 = arith.constant 4 : index
    %33 = memref.load %arg1[%c4] : memref<20xf32, #tpu.memory_space<smem>>
    %34 = vector.broadcast %33 : f32 to vector<30x30xf32>
    %35 = arith.mulf %32, %34 : vector<30x30xf32>
    %36 = arith.addf %26, %35 : vector<30x30xf32>
    %37 = vector.extract_strided_slice %0 {offsets = [1, 0], sizes = [29, 30], strides = [1, 1]} : vector<30x30xf32> to vector<29x30xf32>
    %38 = vector.extract_strided_slice %0 {offsets = [0, 0], sizes = [1, 30], strides = [1, 1]} : vector<30x30xf32> to vector<1x30xf32>
    %39 = tpu.concatenate %37, %38 in 0 : vector<29x30xf32>, vector<1x30xf32> -> vector<30x30xf32>
    %40 = vector.extract_strided_slice %39 {offsets = [0, 2], sizes = [30, 28], strides = [1, 1]} : vector<30x30xf32> to vector<30x28xf32>
    %41 = vector.extract_strided_slice %39 {offsets = [0, 0], sizes = [30, 2], strides = [1, 1]} : vector<30x30xf32> to vector<30x2xf32>
    %42 = tpu.concatenate %40, %41 in 1 : vector<30x28xf32>, vector<30x2xf32> -> vector<30x30xf32>
    %c5 = arith.constant 5 : index
    %43 = memref.load %arg1[%c5] : memref<20xf32, #tpu.memory_space<smem>>
    %44 = vector.broadcast %43 : f32 to vector<30x30xf32>
    %45 = arith.mulf %42, %44 : vector<30x30xf32>
    %46 = arith.addf %36, %45 : vector<30x30xf32>
    %47 = vector.extract_strided_slice %0 {offsets = [2, 0], sizes = [28, 30], strides = [1, 1]} : vector<30x30xf32> to vector<28x30xf32>
    %48 = vector.extract_strided_slice %0 {offsets = [0, 0], sizes = [2, 30], strides = [1, 1]} : vector<30x30xf32> to vector<2x30xf32>
    %49 = tpu.concatenate %47, %48 in 0 : vector<28x30xf32>, vector<2x30xf32> -> vector<30x30xf32>
    %c6 = arith.constant 6 : index
    %50 = memref.load %arg1[%c6] : memref<20xf32, #tpu.memory_space<smem>>
    %51 = vector.broadcast %50 : f32 to vector<30x30xf32>
    %52 = arith.mulf %49, %51 : vector<30x30xf32>
    %53 = arith.addf %46, %52 : vector<30x30xf32>
    %54 = vector.extract_strided_slice %0 {offsets = [2, 0], sizes = [28, 30], strides = [1, 1]} : vector<30x30xf32> to vector<28x30xf32>
    %55 = vector.extract_strided_slice %0 {offsets = [0, 0], sizes = [2, 30], strides = [1, 1]} : vector<30x30xf32> to vector<2x30xf32>
    %56 = tpu.concatenate %54, %55 in 0 : vector<28x30xf32>, vector<2x30xf32> -> vector<30x30xf32>
    %57 = vector.extract_strided_slice %56 {offsets = [0, 1], sizes = [30, 29], strides = [1, 1]} : vector<30x30xf32> to vector<30x29xf32>
    %58 = vector.extract_strided_slice %56 {offsets = [0, 0], sizes = [30, 1], strides = [1, 1]} : vector<30x30xf32> to vector<30x1xf32>
    %59 = tpu.concatenate %57, %58 in 1 : vector<30x29xf32>, vector<30x1xf32> -> vector<30x30xf32>
    %c7 = arith.constant 7 : index
    %60 = memref.load %arg1[%c7] : memref<20xf32, #tpu.memory_space<smem>>
    %61 = vector.broadcast %60 : f32 to vector<30x30xf32>
    %62 = arith.mulf %59, %61 : vector<30x30xf32>
    %63 = arith.addf %53, %62 : vector<30x30xf32>
    %64 = vector.extract_strided_slice %0 {offsets = [2, 0], sizes = [28, 30], strides = [1, 1]} : vector<30x30xf32> to vector<28x30xf32>
    %65 = vector.extract_strided_slice %0 {offsets = [0, 0], sizes = [2, 30], strides = [1, 1]} : vector<30x30xf32> to vector<2x30xf32>
    %66 = tpu.concatenate %64, %65 in 0 : vector<28x30xf32>, vector<2x30xf32> -> vector<30x30xf32>
    %67 = vector.extract_strided_slice %66 {offsets = [0, 2], sizes = [30, 28], strides = [1, 1]} : vector<30x30xf32> to vector<30x28xf32>
    %68 = vector.extract_strided_slice %66 {offsets = [0, 0], sizes = [30, 2], strides = [1, 1]} : vector<30x30xf32> to vector<30x2xf32>
    %69 = tpu.concatenate %67, %68 in 1 : vector<30x28xf32>, vector<30x2xf32> -> vector<30x30xf32>
    %c8 = arith.constant 8 : index
    %70 = memref.load %arg1[%c8] : memref<20xf32, #tpu.memory_space<smem>>
    %71 = vector.broadcast %70 : f32 to vector<30x30xf32>
    %72 = arith.mulf %69, %71 : vector<30x30xf32>
    %73 = arith.addf %63, %72 : vector<30x30xf32>
    %c9 = arith.constant 9 : index
    %74 = memref.load %arg1[%c9] : memref<20xf32, #tpu.memory_space<smem>>
    %75 = vector.broadcast %74 : f32 to vector<30x30xf32>
    %76 = arith.addf %73, %75 : vector<30x30xf32>
    %77 = tpu.iota {dimensions = array<i32: 0>} : vector<30x30xi32>
    %78 = tpu.iota {dimensions = array<i32: 1>} : vector<30x30xi32>
    %c28_i32 = arith.constant 28 : i32
    %79 = vector.broadcast %c28_i32 : i32 to vector<30x30xi32>
    %80 = arith.cmpi slt, %77, %79 : vector<30x30xi32>
    %c28_i32_2 = arith.constant 28 : i32
    %81 = vector.broadcast %c28_i32_2 : i32 to vector<30x30xi32>
    %82 = arith.cmpi slt, %78, %81 : vector<30x30xi32>
    %83 = arith.andi %80, %82 : vector<30x30xi1>
    %c2_i32 = arith.constant 2 : i32
    %c0_i32 = arith.constant 0 : i32
    %84 = arith.cmpi eq, %c2_i32, %c0_i32 : i32
    %c1_i32 = arith.constant 1 : i32
    %85 = arith.select %84, %c1_i32, %c2_i32 : i32
    %86 = vector.broadcast %85 : i32 to vector<30x30xi32>
    %87 = arith.remsi %77, %86 : vector<30x30xi32>
    %c0_i32_3 = arith.constant 0 : i32
    %88 = vector.broadcast %c0_i32_3 : i32 to vector<30x30xi32>
    %89 = arith.cmpi ne, %87, %88 : vector<30x30xi32>
    %c0_i32_4 = arith.constant 0 : i32
    %90 = vector.broadcast %c0_i32_4 : i32 to vector<30x30xi32>
    %91 = arith.cmpi slt, %87, %90 : vector<30x30xi32>
    %c0_i32_5 = arith.constant 0 : i32
    %92 = arith.cmpi slt, %85, %c0_i32_5 : i32
    %93 = vector.broadcast %92 : i1 to vector<30x30xi1>
    %94 = vector.broadcast %93 : vector<30x30xi1> to vector<30x30xi1>
    %95 = arith.xori %91, %94 : vector<30x30xi1>
    %96 = arith.andi %95, %89 : vector<30x30xi1>
    %97 = vector.broadcast %85 : i32 to vector<30x30xi32>
    %98 = arith.addi %87, %97 : vector<30x30xi32>
    %99 = arith.select %96, %98, %87 : vector<30x30xi1>, vector<30x30xi32>
    %c1_i32_6 = arith.constant 1 : i32
    %100 = vector.broadcast %c1_i32_6 : i32 to vector<30x30xi32>
    %101 = arith.cmpi eq, %99, %100 : vector<30x30xi32>
    %c2_i32_7 = arith.constant 2 : i32
    %c0_i32_8 = arith.constant 0 : i32
    %102 = arith.cmpi eq, %c2_i32_7, %c0_i32_8 : i32
    %c1_i32_9 = arith.constant 1 : i32
    %103 = arith.select %102, %c1_i32_9, %c2_i32_7 : i32
    %104 = vector.broadcast %103 : i32 to vector<30x30xi32>
    %105 = arith.remsi %78, %104 : vector<30x30xi32>
    %c0_i32_10 = arith.constant 0 : i32
    %106 = vector.broadcast %c0_i32_10 : i32 to vector<30x30xi32>
    %107 = arith.cmpi ne, %105, %106 : vector<30x30xi32>
    %c0_i32_11 = arith.constant 0 : i32
    %108 = vector.broadcast %c0_i32_11 : i32 to vector<30x30xi32>
    %109 = arith.cmpi slt, %105, %108 : vector<30x30xi32>
    %c0_i32_12 = arith.constant 0 : i32
    %110 = arith.cmpi slt, %103, %c0_i32_12 : i32
    %111 = vector.broadcast %110 : i1 to vector<30x30xi1>
    %112 = vector.broadcast %111 : vector<30x30xi1> to vector<30x30xi1>
    %113 = arith.xori %109, %112 : vector<30x30xi1>
    %114 = arith.andi %113, %107 : vector<30x30xi1>
    %115 = vector.broadcast %103 : i32 to vector<30x30xi32>
    %116 = arith.addi %105, %115 : vector<30x30xi32>
    %117 = arith.select %114, %116, %105 : vector<30x30xi1>, vector<30x30xi32>
    %c1_i32_13 = arith.constant 1 : i32
    %118 = vector.broadcast %c1_i32_13 : i32 to vector<30x30xi32>
    %119 = arith.cmpi eq, %117, %118 : vector<30x30xi32>
    %cst_14 = arith.constant -1.000000e+30 : f32
    %120 = vector.broadcast %cst_14 : f32 to vector<30x30xf32>
    %121 = arith.select %83, %76, %120 : vector<30x30xi1>, vector<30x30xf32>
    %122 = vector.extract_strided_slice %121 {offsets = [29, 0], sizes = [1, 30], strides = [1, 1]} : vector<30x30xf32> to vector<1x30xf32>
    %123 = vector.extract_strided_slice %121 {offsets = [0, 0], sizes = [29, 30], strides = [1, 1]} : vector<30x30xf32> to vector<29x30xf32>
    %124 = tpu.concatenate %122, %123 in 0 : vector<1x30xf32>, vector<29x30xf32> -> vector<30x30xf32>
    %125 = vector.extract_strided_slice %121 {offsets = [1, 0], sizes = [29, 30], strides = [1, 1]} : vector<30x30xf32> to vector<29x30xf32>
    %126 = vector.extract_strided_slice %121 {offsets = [0, 0], sizes = [1, 30], strides = [1, 1]} : vector<30x30xf32> to vector<1x30xf32>
    %127 = tpu.concatenate %125, %126 in 0 : vector<29x30xf32>, vector<1x30xf32> -> vector<30x30xf32>
    %128 = vector.extract_strided_slice %121 {offsets = [0, 29], sizes = [30, 1], strides = [1, 1]} : vector<30x30xf32> to vector<30x1xf32>
    %129 = vector.extract_strided_slice %121 {offsets = [0, 0], sizes = [30, 29], strides = [1, 1]} : vector<30x30xf32> to vector<30x29xf32>
    %130 = tpu.concatenate %128, %129 in 1 : vector<30x1xf32>, vector<30x29xf32> -> vector<30x30xf32>
    %131 = vector.extract_strided_slice %121 {offsets = [0, 1], sizes = [30, 29], strides = [1, 1]} : vector<30x30xf32> to vector<30x29xf32>
    %132 = vector.extract_strided_slice %121 {offsets = [0, 0], sizes = [30, 1], strides = [1, 1]} : vector<30x30xf32> to vector<30x1xf32>
    %133 = tpu.concatenate %131, %132 in 1 : vector<30x29xf32>, vector<30x1xf32> -> vector<30x30xf32>
    %134 = vector.extract_strided_slice %121 {offsets = [29, 0], sizes = [1, 30], strides = [1, 1]} : vector<30x30xf32> to vector<1x30xf32>
    %135 = vector.extract_strided_slice %121 {offsets = [0, 0], sizes = [29, 30], strides = [1, 1]} : vector<30x30xf32> to vector<29x30xf32>
    %136 = tpu.concatenate %134, %135 in 0 : vector<1x30xf32>, vector<29x30xf32> -> vector<30x30xf32>
    %137 = vector.extract_strided_slice %136 {offsets = [0, 29], sizes = [30, 1], strides = [1, 1]} : vector<30x30xf32> to vector<30x1xf32>
    %138 = vector.extract_strided_slice %136 {offsets = [0, 0], sizes = [30, 29], strides = [1, 1]} : vector<30x30xf32> to vector<30x29xf32>
    %139 = tpu.concatenate %137, %138 in 1 : vector<30x1xf32>, vector<30x29xf32> -> vector<30x30xf32>
    %140 = vector.extract_strided_slice %121 {offsets = [29, 0], sizes = [1, 30], strides = [1, 1]} : vector<30x30xf32> to vector<1x30xf32>
    %141 = vector.extract_strided_slice %121 {offsets = [0, 0], sizes = [29, 30], strides = [1, 1]} : vector<30x30xf32> to vector<29x30xf32>
    %142 = tpu.concatenate %140, %141 in 0 : vector<1x30xf32>, vector<29x30xf32> -> vector<30x30xf32>
    %143 = vector.extract_strided_slice %142 {offsets = [0, 1], sizes = [30, 29], strides = [1, 1]} : vector<30x30xf32> to vector<30x29xf32>
    %144 = vector.extract_strided_slice %142 {offsets = [0, 0], sizes = [30, 1], strides = [1, 1]} : vector<30x30xf32> to vector<30x1xf32>
    %145 = tpu.concatenate %143, %144 in 1 : vector<30x29xf32>, vector<30x1xf32> -> vector<30x30xf32>
    %146 = vector.extract_strided_slice %121 {offsets = [1, 0], sizes = [29, 30], strides = [1, 1]} : vector<30x30xf32> to vector<29x30xf32>
    %147 = vector.extract_strided_slice %121 {offsets = [0, 0], sizes = [1, 30], strides = [1, 1]} : vector<30x30xf32> to vector<1x30xf32>
    %148 = tpu.concatenate %146, %147 in 0 : vector<29x30xf32>, vector<1x30xf32> -> vector<30x30xf32>
    %149 = vector.extract_strided_slice %148 {offsets = [0, 29], sizes = [30, 1], strides = [1, 1]} : vector<30x30xf32> to vector<30x1xf32>
    %150 = vector.extract_strided_slice %148 {offsets = [0, 0], sizes = [30, 29], strides = [1, 1]} : vector<30x30xf32> to vector<30x29xf32>
    %151 = tpu.concatenate %149, %150 in 1 : vector<30x1xf32>, vector<30x29xf32> -> vector<30x30xf32>
    %152 = vector.extract_strided_slice %121 {offsets = [1, 0], sizes = [29, 30], strides = [1, 1]} : vector<30x30xf32> to vector<29x30xf32>
    %153 = vector.extract_strided_slice %121 {offsets = [0, 0], sizes = [1, 30], strides = [1, 1]} : vector<30x30xf32> to vector<1x30xf32>
    %154 = tpu.concatenate %152, %153 in 0 : vector<29x30xf32>, vector<1x30xf32> -> vector<30x30xf32>
    %155 = vector.extract_strided_slice %154 {offsets = [0, 1], sizes = [30, 29], strides = [1, 1]} : vector<30x30xf32> to vector<30x29xf32>
    %156 = vector.extract_strided_slice %154 {offsets = [0, 0], sizes = [30, 1], strides = [1, 1]} : vector<30x30xf32> to vector<30x1xf32>
    %157 = tpu.concatenate %155, %156 in 1 : vector<30x29xf32>, vector<30x1xf32> -> vector<30x30xf32>
    %158 = arith.select %101, %127, %124 : vector<30x30xi1>, vector<30x30xf32>
    %159 = arith.select %119, %133, %130 : vector<30x30xi1>, vector<30x30xf32>
    %160 = arith.select %119, %157, %151 : vector<30x30xi1>, vector<30x30xf32>
    %161 = arith.select %119, %145, %139 : vector<30x30xi1>, vector<30x30xf32>
    %162 = arith.select %101, %160, %161 : vector<30x30xi1>, vector<30x30xf32>
    %163 = arith.maximumf %121, %158 : vector<30x30xf32>
    %164 = arith.maximumf %159, %162 : vector<30x30xf32>
    %165 = arith.maximumf %163, %164 : vector<30x30xf32>
    %166 = arith.cmpf ogt, %121, %158 : vector<30x30xf32>
    %167 = arith.cmpf oeq, %121, %158 : vector<30x30xf32>
    %168 = arith.andi %101, %167 : vector<30x30xi1>
    %169 = arith.ori %166, %168 : vector<30x30xi1>
    %170 = arith.cmpf ogt, %121, %162 : vector<30x30xf32>
    %171 = arith.cmpf oeq, %121, %162 : vector<30x30xf32>
    %172 = arith.andi %101, %171 : vector<30x30xi1>
    %173 = arith.ori %170, %172 : vector<30x30xi1>
    %174 = arith.cmpf ogt, %121, %159 : vector<30x30xf32>
    %175 = arith.cmpf oeq, %121, %159 : vector<30x30xf32>
    %176 = arith.andi %119, %175 : vector<30x30xi1>
    %177 = arith.ori %174, %176 : vector<30x30xi1>
    %178 = arith.andi %169, %173 : vector<30x30xi1>
    %179 = arith.andi %178, %177 : vector<30x30xi1>
    %180 = arith.andi %179, %83 : vector<30x30xi1>
    %c0_15 = arith.constant 0 : index
    %c0_16 = arith.constant 0 : index
    %181 = vector.load %arg2[%c0_15, %c0_16] : memref<15x30xf32, #tpu.memory_space<vmem>>, vector<15x30xf32>
    %cst_17 = arith.constant dense<0.000000e+00> : vector<15x30xf32>
    %182 = tpu.matmul %181, %165, %cst_17 {dimension_numbers = #tpu.dot_dimension_numbers<[1], [0], [0], [1], [0, 0, 1, 1], [], []>} : vector<15x30xf32>, vector<30x30xf32>, vector<15x30xf32> -> vector<15x30xf32>
    %c0_18 = arith.constant 0 : index
    %c0_19 = arith.constant 0 : index
    %183 = vector.load %arg3[%c0_18, %c0_19] : memref<30x15xf32, #tpu.memory_space<vmem>>, vector<30x15xf32>
    %cst_20 = arith.constant dense<0.000000e+00> : vector<15x15xf32>
    %184 = tpu.matmul %182, %183, %cst_20 {dimension_numbers = #tpu.dot_dimension_numbers<[1], [0], [0], [1], [0, 0, 1, 1], [], []>} : vector<15x30xf32>, vector<30x15xf32>, vector<15x15xf32> -> vector<15x15xf32>
    %c0_21 = arith.constant 0 : index
    %c0_22 = arith.constant 0 : index
    %185 = vector.load %arg5[%c0_21, %c0_22] : memref<1x50xf32, #tpu.memory_space<vmem>>, vector<1x50xf32>
    %186 = vector.extract_strided_slice %184 {offsets = [0, 0], sizes = [1, 15], strides = [1, 1]} : vector<15x15xf32> to vector<1x15xf32>
    %c0_23 = arith.constant 0 : index
    %c0_24 = arith.constant 0 : index
    %c0_25 = arith.constant 0 : index
    %187 = vector.load %arg4[%c0_23, %c0_24, %c0_25] : memref<15x15x50xf32, #tpu.memory_space<vmem>>, vector<1x15x50xf32>
    %188 = vector.shape_cast %187 : vector<1x15x50xf32> to vector<15x50xf32>
    %cst_26 = arith.constant dense<0.000000e+00> : vector<1x50xf32>
    %189 = tpu.matmul %186, %188, %cst_26 {dimension_numbers = #tpu.dot_dimension_numbers<[1], [0], [0], [1], [0, 0, 1, 1], [], []>} : vector<1x15xf32>, vector<15x50xf32>, vector<1x50xf32> -> vector<1x50xf32>
    %190 = arith.addf %185, %189 : vector<1x50xf32>
    %191 = vector.extract_strided_slice %184 {offsets = [1, 0], sizes = [1, 15], strides = [1, 1]} : vector<15x15xf32> to vector<1x15xf32>
    %c1_27 = arith.constant 1 : index
    %c0_28 = arith.constant 0 : index
    %c0_29 = arith.constant 0 : index
    %192 = vector.load %arg4[%c1_27, %c0_28, %c0_29] : memref<15x15x50xf32, #tpu.memory_space<vmem>>, vector<1x15x50xf32>
    %193 = vector.shape_cast %192 : vector<1x15x50xf32> to vector<15x50xf32>
    %cst_30 = arith.constant dense<0.000000e+00> : vector<1x50xf32>
    %194 = tpu.matmul %191, %193, %cst_30 {dimension_numbers = #tpu.dot_dimension_numbers<[1], [0], [0], [1], [0, 0, 1, 1], [], []>} : vector<1x15xf32>, vector<15x50xf32>, vector<1x50xf32> -> vector<1x50xf32>
    %195 = arith.addf %190, %194 : vector<1x50xf32>
    %196 = vector.extract_strided_slice %184 {offsets = [2, 0], sizes = [1, 15], strides = [1, 1]} : vector<15x15xf32> to vector<1x15xf32>
    %c2_31 = arith.constant 2 : index
    %c0_32 = arith.constant 0 : index
    %c0_33 = arith.constant 0 : index
    %197 = vector.load %arg4[%c2_31, %c0_32, %c0_33] : memref<15x15x50xf32, #tpu.memory_space<vmem>>, vector<1x15x50xf32>
    %198 = vector.shape_cast %197 : vector<1x15x50xf32> to vector<15x50xf32>
    %cst_34 = arith.constant dense<0.000000e+00> : vector<1x50xf32>
    %199 = tpu.matmul %196, %198, %cst_34 {dimension_numbers = #tpu.dot_dimension_numbers<[1], [0], [0], [1], [0, 0, 1, 1], [], []>} : vector<1x15xf32>, vector<15x50xf32>, vector<1x50xf32> -> vector<1x50xf32>
    %200 = arith.addf %195, %199 : vector<1x50xf32>
    %201 = vector.extract_strided_slice %184 {offsets = [3, 0], sizes = [1, 15], strides = [1, 1]} : vector<15x15xf32> to vector<1x15xf32>
    %c3_35 = arith.constant 3 : index
    %c0_36 = arith.constant 0 : index
    %c0_37 = arith.constant 0 : index
    %202 = vector.load %arg4[%c3_35, %c0_36, %c0_37] : memref<15x15x50xf32, #tpu.memory_space<vmem>>, vector<1x15x50xf32>
    %203 = vector.shape_cast %202 : vector<1x15x50xf32> to vector<15x50xf32>
    %cst_38 = arith.constant dense<0.000000e+00> : vector<1x50xf32>
    %204 = tpu.matmul %201, %203, %cst_38 {dimension_numbers = #tpu.dot_dimension_numbers<[1], [0], [0], [1], [0, 0, 1, 1], [], []>} : vector<1x15xf32>, vector<15x50xf32>, vector<1x50xf32> -> vector<1x50xf32>
    %205 = arith.addf %200, %204 : vector<1x50xf32>
    %206 = vector.extract_strided_slice %184 {offsets = [4, 0], sizes = [1, 15], strides = [1, 1]} : vector<15x15xf32> to vector<1x15xf32>
    %c4_39 = arith.constant 4 : index
    %c0_40 = arith.constant 0 : index
    %c0_41 = arith.constant 0 : index
    %207 = vector.load %arg4[%c4_39, %c0_40, %c0_41] : memref<15x15x50xf32, #tpu.memory_space<vmem>>, vector<1x15x50xf32>
    %208 = vector.shape_cast %207 : vector<1x15x50xf32> to vector<15x50xf32>
    %cst_42 = arith.constant dense<0.000000e+00> : vector<1x50xf32>
    %209 = tpu.matmul %206, %208, %cst_42 {dimension_numbers = #tpu.dot_dimension_numbers<[1], [0], [0], [1], [0, 0, 1, 1], [], []>} : vector<1x15xf32>, vector<15x50xf32>, vector<1x50xf32> -> vector<1x50xf32>
    %210 = arith.addf %205, %209 : vector<1x50xf32>
    %211 = vector.extract_strided_slice %184 {offsets = [5, 0], sizes = [1, 15], strides = [1, 1]} : vector<15x15xf32> to vector<1x15xf32>
    %c5_43 = arith.constant 5 : index
    %c0_44 = arith.constant 0 : index
    %c0_45 = arith.constant 0 : index
    %212 = vector.load %arg4[%c5_43, %c0_44, %c0_45] : memref<15x15x50xf32, #tpu.memory_space<vmem>>, vector<1x15x50xf32>
    %213 = vector.shape_cast %212 : vector<1x15x50xf32> to vector<15x50xf32>
    %cst_46 = arith.constant dense<0.000000e+00> : vector<1x50xf32>
    %214 = tpu.matmul %211, %213, %cst_46 {dimension_numbers = #tpu.dot_dimension_numbers<[1], [0], [0], [1], [0, 0, 1, 1], [], []>} : vector<1x15xf32>, vector<15x50xf32>, vector<1x50xf32> -> vector<1x50xf32>
    %215 = arith.addf %210, %214 : vector<1x50xf32>
    %216 = vector.extract_strided_slice %184 {offsets = [6, 0], sizes = [1, 15], strides = [1, 1]} : vector<15x15xf32> to vector<1x15xf32>
    %c6_47 = arith.constant 6 : index
    %c0_48 = arith.constant 0 : index
    %c0_49 = arith.constant 0 : index
    %217 = vector.load %arg4[%c6_47, %c0_48, %c0_49] : memref<15x15x50xf32, #tpu.memory_space<vmem>>, vector<1x15x50xf32>
    %218 = vector.shape_cast %217 : vector<1x15x50xf32> to vector<15x50xf32>
    %cst_50 = arith.constant dense<0.000000e+00> : vector<1x50xf32>
    %219 = tpu.matmul %216, %218, %cst_50 {dimension_numbers = #tpu.dot_dimension_numbers<[1], [0], [0], [1], [0, 0, 1, 1], [], []>} : vector<1x15xf32>, vector<15x50xf32>, vector<1x50xf32> -> vector<1x50xf32>
    %220 = arith.addf %215, %219 : vector<1x50xf32>
    %221 = vector.extract_strided_slice %184 {offsets = [7, 0], sizes = [1, 15], strides = [1, 1]} : vector<15x15xf32> to vector<1x15xf32>
    %c7_51 = arith.constant 7 : index
    %c0_52 = arith.constant 0 : index
    %c0_53 = arith.constant 0 : index
    %222 = vector.load %arg4[%c7_51, %c0_52, %c0_53] : memref<15x15x50xf32, #tpu.memory_space<vmem>>, vector<1x15x50xf32>
    %223 = vector.shape_cast %222 : vector<1x15x50xf32> to vector<15x50xf32>
    %cst_54 = arith.constant dense<0.000000e+00> : vector<1x50xf32>
    %224 = tpu.matmul %221, %223, %cst_54 {dimension_numbers = #tpu.dot_dimension_numbers<[1], [0], [0], [1], [0, 0, 1, 1], [], []>} : vector<1x15xf32>, vector<15x50xf32>, vector<1x50xf32> -> vector<1x50xf32>
    %225 = arith.addf %220, %224 : vector<1x50xf32>
    %226 = vector.extract_strided_slice %184 {offsets = [8, 0], sizes = [1, 15], strides = [1, 1]} : vector<15x15xf32> to vector<1x15xf32>
    %c8_55 = arith.constant 8 : index
    %c0_56 = arith.constant 0 : index
    %c0_57 = arith.constant 0 : index
    %227 = vector.load %arg4[%c8_55, %c0_56, %c0_57] : memref<15x15x50xf32, #tpu.memory_space<vmem>>, vector<1x15x50xf32>
    %228 = vector.shape_cast %227 : vector<1x15x50xf32> to vector<15x50xf32>
    %cst_58 = arith.constant dense<0.000000e+00> : vector<1x50xf32>
    %229 = tpu.matmul %226, %228, %cst_58 {dimension_numbers = #tpu.dot_dimension_numbers<[1], [0], [0], [1], [0, 0, 1, 1], [], []>} : vector<1x15xf32>, vector<15x50xf32>, vector<1x50xf32> -> vector<1x50xf32>
    %230 = arith.addf %225, %229 : vector<1x50xf32>
    %231 = vector.extract_strided_slice %184 {offsets = [9, 0], sizes = [1, 15], strides = [1, 1]} : vector<15x15xf32> to vector<1x15xf32>
    %c9_59 = arith.constant 9 : index
    %c0_60 = arith.constant 0 : index
    %c0_61 = arith.constant 0 : index
    %232 = vector.load %arg4[%c9_59, %c0_60, %c0_61] : memref<15x15x50xf32, #tpu.memory_space<vmem>>, vector<1x15x50xf32>
    %233 = vector.shape_cast %232 : vector<1x15x50xf32> to vector<15x50xf32>
    %cst_62 = arith.constant dense<0.000000e+00> : vector<1x50xf32>
    %234 = tpu.matmul %231, %233, %cst_62 {dimension_numbers = #tpu.dot_dimension_numbers<[1], [0], [0], [1], [0, 0, 1, 1], [], []>} : vector<1x15xf32>, vector<15x50xf32>, vector<1x50xf32> -> vector<1x50xf32>
    %235 = arith.addf %230, %234 : vector<1x50xf32>
    %236 = vector.extract_strided_slice %184 {offsets = [10, 0], sizes = [1, 15], strides = [1, 1]} : vector<15x15xf32> to vector<1x15xf32>
    %c10 = arith.constant 10 : index
    %c0_63 = arith.constant 0 : index
    %c0_64 = arith.constant 0 : index
    %237 = vector.load %arg4[%c10, %c0_63, %c0_64] : memref<15x15x50xf32, #tpu.memory_space<vmem>>, vector<1x15x50xf32>
    %238 = vector.shape_cast %237 : vector<1x15x50xf32> to vector<15x50xf32>
    %cst_65 = arith.constant dense<0.000000e+00> : vector<1x50xf32>
    %239 = tpu.matmul %236, %238, %cst_65 {dimension_numbers = #tpu.dot_dimension_numbers<[1], [0], [0], [1], [0, 0, 1, 1], [], []>} : vector<1x15xf32>, vector<15x50xf32>, vector<1x50xf32> -> vector<1x50xf32>
    %240 = arith.addf %235, %239 : vector<1x50xf32>
    %241 = vector.extract_strided_slice %184 {offsets = [11, 0], sizes = [1, 15], strides = [1, 1]} : vector<15x15xf32> to vector<1x15xf32>
    %c11 = arith.constant 11 : index
    %c0_66 = arith.constant 0 : index
    %c0_67 = arith.constant 0 : index
    %242 = vector.load %arg4[%c11, %c0_66, %c0_67] : memref<15x15x50xf32, #tpu.memory_space<vmem>>, vector<1x15x50xf32>
    %243 = vector.shape_cast %242 : vector<1x15x50xf32> to vector<15x50xf32>
    %cst_68 = arith.constant dense<0.000000e+00> : vector<1x50xf32>
    %244 = tpu.matmul %241, %243, %cst_68 {dimension_numbers = #tpu.dot_dimension_numbers<[1], [0], [0], [1], [0, 0, 1, 1], [], []>} : vector<1x15xf32>, vector<15x50xf32>, vector<1x50xf32> -> vector<1x50xf32>
    %245 = arith.addf %240, %244 : vector<1x50xf32>
    %246 = vector.extract_strided_slice %184 {offsets = [12, 0], sizes = [1, 15], strides = [1, 1]} : vector<15x15xf32> to vector<1x15xf32>
    %c12 = arith.constant 12 : index
    %c0_69 = arith.constant 0 : index
    %c0_70 = arith.constant 0 : index
    %247 = vector.load %arg4[%c12, %c0_69, %c0_70] : memref<15x15x50xf32, #tpu.memory_space<vmem>>, vector<1x15x50xf32>
    %248 = vector.shape_cast %247 : vector<1x15x50xf32> to vector<15x50xf32>
    %cst_71 = arith.constant dense<0.000000e+00> : vector<1x50xf32>
    %249 = tpu.matmul %246, %248, %cst_71 {dimension_numbers = #tpu.dot_dimension_numbers<[1], [0], [0], [1], [0, 0, 1, 1], [], []>} : vector<1x15xf32>, vector<15x50xf32>, vector<1x50xf32> -> vector<1x50xf32>
    %250 = arith.addf %245, %249 : vector<1x50xf32>
    %251 = vector.extract_strided_slice %184 {offsets = [13, 0], sizes = [1, 15], strides = [1, 1]} : vector<15x15xf32> to vector<1x15xf32>
    %c13 = arith.constant 13 : index
    %c0_72 = arith.constant 0 : index
    %c0_73 = arith.constant 0 : index
    %252 = vector.load %arg4[%c13, %c0_72, %c0_73] : memref<15x15x50xf32, #tpu.memory_space<vmem>>, vector<1x15x50xf32>
    %253 = vector.shape_cast %252 : vector<1x15x50xf32> to vector<15x50xf32>
    %cst_74 = arith.constant dense<0.000000e+00> : vector<1x50xf32>
    %254 = tpu.matmul %251, %253, %cst_74 {dimension_numbers = #tpu.dot_dimension_numbers<[1], [0], [0], [1], [0, 0, 1, 1], [], []>} : vector<1x15xf32>, vector<15x50xf32>, vector<1x50xf32> -> vector<1x50xf32>
    %255 = arith.addf %250, %254 : vector<1x50xf32>
    %256 = vector.extract_strided_slice %184 {offsets = [14, 0], sizes = [1, 15], strides = [1, 1]} : vector<15x15xf32> to vector<1x15xf32>
    %c14 = arith.constant 14 : index
    %c0_75 = arith.constant 0 : index
    %c0_76 = arith.constant 0 : index
    %257 = vector.load %arg4[%c14, %c0_75, %c0_76] : memref<15x15x50xf32, #tpu.memory_space<vmem>>, vector<1x15x50xf32>
    %258 = vector.shape_cast %257 : vector<1x15x50xf32> to vector<15x50xf32>
    %cst_77 = arith.constant dense<0.000000e+00> : vector<1x50xf32>
    %259 = tpu.matmul %256, %258, %cst_77 {dimension_numbers = #tpu.dot_dimension_numbers<[1], [0], [0], [1], [0, 0, 1, 1], [], []>} : vector<1x15xf32>, vector<15x50xf32>, vector<1x50xf32> -> vector<1x50xf32>
    %260 = arith.addf %255, %259 : vector<1x50xf32>
    %c0_78 = arith.constant 0 : index
    %c0_79 = arith.constant 0 : index
    %c0_80 = arith.constant 0 : index
    %261 = vector.load %arg6[%c0_78, %c0_79, %c0_80] : memref<15x50x15xf32, #tpu.memory_space<vmem>>, vector<1x50x15xf32>
    %262 = vector.shape_cast %261 : vector<1x50x15xf32> to vector<50x15xf32>
    %cst_81 = arith.constant dense<0.000000e+00> : vector<1x15xf32>
    %263 = tpu.matmul %260, %262, %cst_81 {dimension_numbers = #tpu.dot_dimension_numbers<[1], [0], [0], [1], [0, 0, 1, 1], [], []>} : vector<1x50xf32>, vector<50x15xf32>, vector<1x15xf32> -> vector<1x15xf32>
    %c1_82 = arith.constant 1 : index
    %c0_83 = arith.constant 0 : index
    %c0_84 = arith.constant 0 : index
    %264 = vector.load %arg6[%c1_82, %c0_83, %c0_84] : memref<15x50x15xf32, #tpu.memory_space<vmem>>, vector<1x50x15xf32>
    %265 = vector.shape_cast %264 : vector<1x50x15xf32> to vector<50x15xf32>
    %cst_85 = arith.constant dense<0.000000e+00> : vector<1x15xf32>
    %266 = tpu.matmul %260, %265, %cst_85 {dimension_numbers = #tpu.dot_dimension_numbers<[1], [0], [0], [1], [0, 0, 1, 1], [], []>} : vector<1x50xf32>, vector<50x15xf32>, vector<1x15xf32> -> vector<1x15xf32>
    %c2_86 = arith.constant 2 : index
    %c0_87 = arith.constant 0 : index
    %c0_88 = arith.constant 0 : index
    %267 = vector.load %arg6[%c2_86, %c0_87, %c0_88] : memref<15x50x15xf32, #tpu.memory_space<vmem>>, vector<1x50x15xf32>
    %268 = vector.shape_cast %267 : vector<1x50x15xf32> to vector<50x15xf32>
    %cst_89 = arith.constant dense<0.000000e+00> : vector<1x15xf32>
    %269 = tpu.matmul %260, %268, %cst_89 {dimension_numbers = #tpu.dot_dimension_numbers<[1], [0], [0], [1], [0, 0, 1, 1], [], []>} : vector<1x50xf32>, vector<50x15xf32>, vector<1x15xf32> -> vector<1x15xf32>
    %c3_90 = arith.constant 3 : index
    %c0_91 = arith.constant 0 : index
    %c0_92 = arith.constant 0 : index
    %270 = vector.load %arg6[%c3_90, %c0_91, %c0_92] : memref<15x50x15xf32, #tpu.memory_space<vmem>>, vector<1x50x15xf32>
    %271 = vector.shape_cast %270 : vector<1x50x15xf32> to vector<50x15xf32>
    %cst_93 = arith.constant dense<0.000000e+00> : vector<1x15xf32>
    %272 = tpu.matmul %260, %271, %cst_93 {dimension_numbers = #tpu.dot_dimension_numbers<[1], [0], [0], [1], [0, 0, 1, 1], [], []>} : vector<1x50xf32>, vector<50x15xf32>, vector<1x15xf32> -> vector<1x15xf32>
    %c4_94 = arith.constant 4 : index
    %c0_95 = arith.constant 0 : index
    %c0_96 = arith.constant 0 : index
    %273 = vector.load %arg6[%c4_94, %c0_95, %c0_96] : memref<15x50x15xf32, #tpu.memory_space<vmem>>, vector<1x50x15xf32>
    %274 = vector.shape_cast %273 : vector<1x50x15xf32> to vector<50x15xf32>
    %cst_97 = arith.constant dense<0.000000e+00> : vector<1x15xf32>
    %275 = tpu.matmul %260, %274, %cst_97 {dimension_numbers = #tpu.dot_dimension_numbers<[1], [0], [0], [1], [0, 0, 1, 1], [], []>} : vector<1x50xf32>, vector<50x15xf32>, vector<1x15xf32> -> vector<1x15xf32>
    %c5_98 = arith.constant 5 : index
    %c0_99 = arith.constant 0 : index
    %c0_100 = arith.constant 0 : index
    %276 = vector.load %arg6[%c5_98, %c0_99, %c0_100] : memref<15x50x15xf32, #tpu.memory_space<vmem>>, vector<1x50x15xf32>
    %277 = vector.shape_cast %276 : vector<1x50x15xf32> to vector<50x15xf32>
    %cst_101 = arith.constant dense<0.000000e+00> : vector<1x15xf32>
    %278 = tpu.matmul %260, %277, %cst_101 {dimension_numbers = #tpu.dot_dimension_numbers<[1], [0], [0], [1], [0, 0, 1, 1], [], []>} : vector<1x50xf32>, vector<50x15xf32>, vector<1x15xf32> -> vector<1x15xf32>
    %c6_102 = arith.constant 6 : index
    %c0_103 = arith.constant 0 : index
    %c0_104 = arith.constant 0 : index
    %279 = vector.load %arg6[%c6_102, %c0_103, %c0_104] : memref<15x50x15xf32, #tpu.memory_space<vmem>>, vector<1x50x15xf32>
    %280 = vector.shape_cast %279 : vector<1x50x15xf32> to vector<50x15xf32>
    %cst_105 = arith.constant dense<0.000000e+00> : vector<1x15xf32>
    %281 = tpu.matmul %260, %280, %cst_105 {dimension_numbers = #tpu.dot_dimension_numbers<[1], [0], [0], [1], [0, 0, 1, 1], [], []>} : vector<1x50xf32>, vector<50x15xf32>, vector<1x15xf32> -> vector<1x15xf32>
    %c7_106 = arith.constant 7 : index
    %c0_107 = arith.constant 0 : index
    %c0_108 = arith.constant 0 : index
    %282 = vector.load %arg6[%c7_106, %c0_107, %c0_108] : memref<15x50x15xf32, #tpu.memory_space<vmem>>, vector<1x50x15xf32>
    %283 = vector.shape_cast %282 : vector<1x50x15xf32> to vector<50x15xf32>
    %cst_109 = arith.constant dense<0.000000e+00> : vector<1x15xf32>
    %284 = tpu.matmul %260, %283, %cst_109 {dimension_numbers = #tpu.dot_dimension_numbers<[1], [0], [0], [1], [0, 0, 1, 1], [], []>} : vector<1x50xf32>, vector<50x15xf32>, vector<1x15xf32> -> vector<1x15xf32>
    %c8_110 = arith.constant 8 : index
    %c0_111 = arith.constant 0 : index
    %c0_112 = arith.constant 0 : index
    %285 = vector.load %arg6[%c8_110, %c0_111, %c0_112] : memref<15x50x15xf32, #tpu.memory_space<vmem>>, vector<1x50x15xf32>
    %286 = vector.shape_cast %285 : vector<1x50x15xf32> to vector<50x15xf32>
    %cst_113 = arith.constant dense<0.000000e+00> : vector<1x15xf32>
    %287 = tpu.matmul %260, %286, %cst_113 {dimension_numbers = #tpu.dot_dimension_numbers<[1], [0], [0], [1], [0, 0, 1, 1], [], []>} : vector<1x50xf32>, vector<50x15xf32>, vector<1x15xf32> -> vector<1x15xf32>
    %c9_114 = arith.constant 9 : index
    %c0_115 = arith.constant 0 : index
    %c0_116 = arith.constant 0 : index
    %288 = vector.load %arg6[%c9_114, %c0_115, %c0_116] : memref<15x50x15xf32, #tpu.memory_space<vmem>>, vector<1x50x15xf32>
    %289 = vector.shape_cast %288 : vector<1x50x15xf32> to vector<50x15xf32>
    %cst_117 = arith.constant dense<0.000000e+00> : vector<1x15xf32>
    %290 = tpu.matmul %260, %289, %cst_117 {dimension_numbers = #tpu.dot_dimension_numbers<[1], [0], [0], [1], [0, 0, 1, 1], [], []>} : vector<1x50xf32>, vector<50x15xf32>, vector<1x15xf32> -> vector<1x15xf32>
    %c10_118 = arith.constant 10 : index
    %c0_119 = arith.constant 0 : index
    %c0_120 = arith.constant 0 : index
    %291 = vector.load %arg6[%c10_118, %c0_119, %c0_120] : memref<15x50x15xf32, #tpu.memory_space<vmem>>, vector<1x50x15xf32>
    %292 = vector.shape_cast %291 : vector<1x50x15xf32> to vector<50x15xf32>
    %cst_121 = arith.constant dense<0.000000e+00> : vector<1x15xf32>
    %293 = tpu.matmul %260, %292, %cst_121 {dimension_numbers = #tpu.dot_dimension_numbers<[1], [0], [0], [1], [0, 0, 1, 1], [], []>} : vector<1x50xf32>, vector<50x15xf32>, vector<1x15xf32> -> vector<1x15xf32>
    %c11_122 = arith.constant 11 : index
    %c0_123 = arith.constant 0 : index
    %c0_124 = arith.constant 0 : index
    %294 = vector.load %arg6[%c11_122, %c0_123, %c0_124] : memref<15x50x15xf32, #tpu.memory_space<vmem>>, vector<1x50x15xf32>
    %295 = vector.shape_cast %294 : vector<1x50x15xf32> to vector<50x15xf32>
    %cst_125 = arith.constant dense<0.000000e+00> : vector<1x15xf32>
    %296 = tpu.matmul %260, %295, %cst_125 {dimension_numbers = #tpu.dot_dimension_numbers<[1], [0], [0], [1], [0, 0, 1, 1], [], []>} : vector<1x50xf32>, vector<50x15xf32>, vector<1x15xf32> -> vector<1x15xf32>
    %c12_126 = arith.constant 12 : index
    %c0_127 = arith.constant 0 : index
    %c0_128 = arith.constant 0 : index
    %297 = vector.load %arg6[%c12_126, %c0_127, %c0_128] : memref<15x50x15xf32, #tpu.memory_space<vmem>>, vector<1x50x15xf32>
    %298 = vector.shape_cast %297 : vector<1x50x15xf32> to vector<50x15xf32>
    %cst_129 = arith.constant dense<0.000000e+00> : vector<1x15xf32>
    %299 = tpu.matmul %260, %298, %cst_129 {dimension_numbers = #tpu.dot_dimension_numbers<[1], [0], [0], [1], [0, 0, 1, 1], [], []>} : vector<1x50xf32>, vector<50x15xf32>, vector<1x15xf32> -> vector<1x15xf32>
    %c13_130 = arith.constant 13 : index
    %c0_131 = arith.constant 0 : index
    %c0_132 = arith.constant 0 : index
    %300 = vector.load %arg6[%c13_130, %c0_131, %c0_132] : memref<15x50x15xf32, #tpu.memory_space<vmem>>, vector<1x50x15xf32>
    %301 = vector.shape_cast %300 : vector<1x50x15xf32> to vector<50x15xf32>
    %cst_133 = arith.constant dense<0.000000e+00> : vector<1x15xf32>
    %302 = tpu.matmul %260, %301, %cst_133 {dimension_numbers = #tpu.dot_dimension_numbers<[1], [0], [0], [1], [0, 0, 1, 1], [], []>} : vector<1x50xf32>, vector<50x15xf32>, vector<1x15xf32> -> vector<1x15xf32>
    %c14_134 = arith.constant 14 : index
    %c0_135 = arith.constant 0 : index
    %c0_136 = arith.constant 0 : index
    %303 = vector.load %arg6[%c14_134, %c0_135, %c0_136] : memref<15x50x15xf32, #tpu.memory_space<vmem>>, vector<1x50x15xf32>
    %304 = vector.shape_cast %303 : vector<1x50x15xf32> to vector<50x15xf32>
    %cst_137 = arith.constant dense<0.000000e+00> : vector<1x15xf32>
    %305 = tpu.matmul %260, %304, %cst_137 {dimension_numbers = #tpu.dot_dimension_numbers<[1], [0], [0], [1], [0, 0, 1, 1], [], []>} : vector<1x50xf32>, vector<50x15xf32>, vector<1x15xf32> -> vector<1x15xf32>
    %306 = tpu.concatenate %263, %266, %269, %272, %275, %278, %281, %284, %287, %290, %293, %296, %299, %302, %305 in 0 : vector<1x15xf32>, vector<1x15xf32>, vector<1x15xf32>, vector<1x15xf32>, vector<1x15xf32>, vector<1x15xf32>, vector<1x15xf32>, vector<1x15xf32>, vector<1x15xf32>, vector<1x15xf32>, vector<1x15xf32>, vector<1x15xf32>, vector<1x15xf32>, vector<1x15xf32>, vector<1x15xf32> -> vector<15x15xf32>
    %c0_138 = arith.constant 0 : index
    %c0_139 = arith.constant 0 : index
    %307 = vector.load %arg7[%c0_138, %c0_139] : memref<15x15xf32, #tpu.memory_space<vmem>>, vector<15x15xf32>
    %308 = arith.addf %306, %307 : vector<15x15xf32>
    %c0_140 = arith.constant 0 : index
    %c0_141 = arith.constant 0 : index
    %309 = vector.load %arg8[%c0_140, %c0_141] : memref<30x15xf32, #tpu.memory_space<vmem>>, vector<30x15xf32>
    %cst_142 = arith.constant dense<0.000000e+00> : vector<30x15xf32>
    %310 = tpu.matmul %309, %308, %cst_142 {dimension_numbers = #tpu.dot_dimension_numbers<[1], [0], [0], [1], [0, 0, 1, 1], [], []>} : vector<30x15xf32>, vector<15x15xf32>, vector<30x15xf32> -> vector<30x15xf32>
    %c0_143 = arith.constant 0 : index
    %c0_144 = arith.constant 0 : index
    %311 = vector.load %arg9[%c0_143, %c0_144] : memref<15x30xf32, #tpu.memory_space<vmem>>, vector<15x30xf32>
    %cst_145 = arith.constant dense<0.000000e+00> : vector<30x30xf32>
    %312 = tpu.matmul %310, %311, %cst_145 {dimension_numbers = #tpu.dot_dimension_numbers<[1], [0], [0], [1], [0, 0, 1, 1], [], []>} : vector<30x15xf32>, vector<15x30xf32>, vector<30x30xf32> -> vector<30x30xf32>
    %cst_146 = arith.constant 0.000000e+00 : f32
    %313 = vector.broadcast %cst_146 : f32 to vector<30x30xf32>
    %314 = arith.select %180, %312, %313 : vector<30x30xi1>, vector<30x30xf32>
    %cst_147 = arith.constant 0.000000e+00 : f32
    %315 = vector.broadcast %cst_147 : f32 to vector<30x30xf32>
    %c10_148 = arith.constant 10 : index
    %316 = memref.load %arg1[%c10_148] : memref<20xf32, #tpu.memory_space<smem>>
    %317 = vector.broadcast %316 : f32 to vector<30x30xf32>
    %318 = arith.mulf %314, %317 : vector<30x30xf32>
    %319 = arith.addf %315, %318 : vector<30x30xf32>
    %320 = vector.extract_strided_slice %314 {offsets = [0, 29], sizes = [30, 1], strides = [1, 1]} : vector<30x30xf32> to vector<30x1xf32>
    %321 = vector.extract_strided_slice %314 {offsets = [0, 0], sizes = [30, 29], strides = [1, 1]} : vector<30x30xf32> to vector<30x29xf32>
    %322 = tpu.concatenate %320, %321 in 1 : vector<30x1xf32>, vector<30x29xf32> -> vector<30x30xf32>
    %c11_149 = arith.constant 11 : index
    %323 = memref.load %arg1[%c11_149] : memref<20xf32, #tpu.memory_space<smem>>
    %324 = vector.broadcast %323 : f32 to vector<30x30xf32>
    %325 = arith.mulf %322, %324 : vector<30x30xf32>
    %326 = arith.addf %319, %325 : vector<30x30xf32>
    %327 = vector.extract_strided_slice %314 {offsets = [0, 28], sizes = [30, 2], strides = [1, 1]} : vector<30x30xf32> to vector<30x2xf32>
    %328 = vector.extract_strided_slice %314 {offsets = [0, 0], sizes = [30, 28], strides = [1, 1]} : vector<30x30xf32> to vector<30x28xf32>
    %329 = tpu.concatenate %327, %328 in 1 : vector<30x2xf32>, vector<30x28xf32> -> vector<30x30xf32>
    %c12_150 = arith.constant 12 : index
    %330 = memref.load %arg1[%c12_150] : memref<20xf32, #tpu.memory_space<smem>>
    %331 = vector.broadcast %330 : f32 to vector<30x30xf32>
    %332 = arith.mulf %329, %331 : vector<30x30xf32>
    %333 = arith.addf %326, %332 : vector<30x30xf32>
    %334 = vector.extract_strided_slice %314 {offsets = [29, 0], sizes = [1, 30], strides = [1, 1]} : vector<30x30xf32> to vector<1x30xf32>
    %335 = vector.extract_strided_slice %314 {offsets = [0, 0], sizes = [29, 30], strides = [1, 1]} : vector<30x30xf32> to vector<29x30xf32>
    %336 = tpu.concatenate %334, %335 in 0 : vector<1x30xf32>, vector<29x30xf32> -> vector<30x30xf32>
    %c13_151 = arith.constant 13 : index
    %337 = memref.load %arg1[%c13_151] : memref<20xf32, #tpu.memory_space<smem>>
    %338 = vector.broadcast %337 : f32 to vector<30x30xf32>
    %339 = arith.mulf %336, %338 : vector<30x30xf32>
    %340 = arith.addf %333, %339 : vector<30x30xf32>
    %341 = vector.extract_strided_slice %314 {offsets = [29, 0], sizes = [1, 30], strides = [1, 1]} : vector<30x30xf32> to vector<1x30xf32>
    %342 = vector.extract_strided_slice %314 {offsets = [0, 0], sizes = [29, 30], strides = [1, 1]} : vector<30x30xf32> to vector<29x30xf32>
    %343 = tpu.concatenate %341, %342 in 0 : vector<1x30xf32>, vector<29x30xf32> -> vector<30x30xf32>
    %344 = vector.extract_strided_slice %343 {offsets = [0, 29], sizes = [30, 1], strides = [1, 1]} : vector<30x30xf32> to vector<30x1xf32>
    %345 = vector.extract_strided_slice %343 {offsets = [0, 0], sizes = [30, 29], strides = [1, 1]} : vector<30x30xf32> to vector<30x29xf32>
    %346 = tpu.concatenate %344, %345 in 1 : vector<30x1xf32>, vector<30x29xf32> -> vector<30x30xf32>
    %c14_152 = arith.constant 14 : index
    %347 = memref.load %arg1[%c14_152] : memref<20xf32, #tpu.memory_space<smem>>
    %348 = vector.broadcast %347 : f32 to vector<30x30xf32>
    %349 = arith.mulf %346, %348 : vector<30x30xf32>
    %350 = arith.addf %340, %349 : vector<30x30xf32>
    %351 = vector.extract_strided_slice %314 {offsets = [29, 0], sizes = [1, 30], strides = [1, 1]} : vector<30x30xf32> to vector<1x30xf32>
    %352 = vector.extract_strided_slice %314 {offsets = [0, 0], sizes = [29, 30], strides = [1, 1]} : vector<30x30xf32> to vector<29x30xf32>
    %353 = tpu.concatenate %351, %352 in 0 : vector<1x30xf32>, vector<29x30xf32> -> vector<30x30xf32>
    %354 = vector.extract_strided_slice %353 {offsets = [0, 28], sizes = [30, 2], strides = [1, 1]} : vector<30x30xf32> to vector<30x2xf32>
    %355 = vector.extract_strided_slice %353 {offsets = [0, 0], sizes = [30, 28], strides = [1, 1]} : vector<30x30xf32> to vector<30x28xf32>
    %356 = tpu.concatenate %354, %355 in 1 : vector<30x2xf32>, vector<30x28xf32> -> vector<30x30xf32>
    %c15 = arith.constant 15 : index
    %357 = memref.load %arg1[%c15] : memref<20xf32, #tpu.memory_space<smem>>
    %358 = vector.broadcast %357 : f32 to vector<30x30xf32>
    %359 = arith.mulf %356, %358 : vector<30x30xf32>
    %360 = arith.addf %350, %359 : vector<30x30xf32>
    %361 = vector.extract_strided_slice %314 {offsets = [28, 0], sizes = [2, 30], strides = [1, 1]} : vector<30x30xf32> to vector<2x30xf32>
    %362 = vector.extract_strided_slice %314 {offsets = [0, 0], sizes = [28, 30], strides = [1, 1]} : vector<30x30xf32> to vector<28x30xf32>
    %363 = tpu.concatenate %361, %362 in 0 : vector<2x30xf32>, vector<28x30xf32> -> vector<30x30xf32>
    %c16 = arith.constant 16 : index
    %364 = memref.load %arg1[%c16] : memref<20xf32, #tpu.memory_space<smem>>
    %365 = vector.broadcast %364 : f32 to vector<30x30xf32>
    %366 = arith.mulf %363, %365 : vector<30x30xf32>
    %367 = arith.addf %360, %366 : vector<30x30xf32>
    %368 = vector.extract_strided_slice %314 {offsets = [28, 0], sizes = [2, 30], strides = [1, 1]} : vector<30x30xf32> to vector<2x30xf32>
    %369 = vector.extract_strided_slice %314 {offsets = [0, 0], sizes = [28, 30], strides = [1, 1]} : vector<30x30xf32> to vector<28x30xf32>
    %370 = tpu.concatenate %368, %369 in 0 : vector<2x30xf32>, vector<28x30xf32> -> vector<30x30xf32>
    %371 = vector.extract_strided_slice %370 {offsets = [0, 29], sizes = [30, 1], strides = [1, 1]} : vector<30x30xf32> to vector<30x1xf32>
    %372 = vector.extract_strided_slice %370 {offsets = [0, 0], sizes = [30, 29], strides = [1, 1]} : vector<30x30xf32> to vector<30x29xf32>
    %373 = tpu.concatenate %371, %372 in 1 : vector<30x1xf32>, vector<30x29xf32> -> vector<30x30xf32>
    %c17 = arith.constant 17 : index
    %374 = memref.load %arg1[%c17] : memref<20xf32, #tpu.memory_space<smem>>
    %375 = vector.broadcast %374 : f32 to vector<30x30xf32>
    %376 = arith.mulf %373, %375 : vector<30x30xf32>
    %377 = arith.addf %367, %376 : vector<30x30xf32>
    %378 = vector.extract_strided_slice %314 {offsets = [28, 0], sizes = [2, 30], strides = [1, 1]} : vector<30x30xf32> to vector<2x30xf32>
    %379 = vector.extract_strided_slice %314 {offsets = [0, 0], sizes = [28, 30], strides = [1, 1]} : vector<30x30xf32> to vector<28x30xf32>
    %380 = tpu.concatenate %378, %379 in 0 : vector<2x30xf32>, vector<28x30xf32> -> vector<30x30xf32>
    %381 = vector.extract_strided_slice %380 {offsets = [0, 28], sizes = [30, 2], strides = [1, 1]} : vector<30x30xf32> to vector<30x2xf32>
    %382 = vector.extract_strided_slice %380 {offsets = [0, 0], sizes = [30, 28], strides = [1, 1]} : vector<30x30xf32> to vector<30x28xf32>
    %383 = tpu.concatenate %381, %382 in 1 : vector<30x2xf32>, vector<30x28xf32> -> vector<30x30xf32>
    %c18 = arith.constant 18 : index
    %384 = memref.load %arg1[%c18] : memref<20xf32, #tpu.memory_space<smem>>
    %385 = vector.broadcast %384 : f32 to vector<30x30xf32>
    %386 = arith.mulf %383, %385 : vector<30x30xf32>
    %387 = arith.addf %377, %386 : vector<30x30xf32>
    %c19 = arith.constant 19 : index
    %388 = memref.load %arg1[%c19] : memref<20xf32, #tpu.memory_space<smem>>
    %389 = vector.broadcast %388 : f32 to vector<30x30xf32>
    %390 = arith.addf %387, %389 : vector<30x30xf32>
    %c0_153 = arith.constant 0 : index
    %c0_154 = arith.constant 0 : index
    %391 = vector.load %arg10[%c0_153, %c0_154] : memref<30x30xf32, #tpu.memory_space<vmem>>, vector<30x30xf32>
    tpu.vector_store %arg10[%c0_153, %c0_154], %390 {strides = array<i32>} : memref<30x30xf32, #tpu.memory_space<vmem>>, vector<30x30xf32>,
    return
  }
}

</mosaic_0001>

<llo_original>
// kernel: pixel_encoder_forward.1
$region0: #{pixel_encoder_forward.1}
  #allocation0 [shape = 'u32[]', space=smem, size = 0x4, offset = 0x4, fixed_abs, tag = 'smem constant byte address 0x4 - core index']
  #allocation1 [shape = 'u32[72,128]{1,0:T(1,128)}', space=vmem, size = 0x9000, scoped, tag = 'internal scratch']
  %s0 = inlined_call_operand.vmem [shape: f32[30,30], index: 0, kind: input, shape index: {}]
  %s1 = inlined_call_operand.vmem [shape: f32[20], index: 1, kind: input, shape index: {}]
  %s2 = inlined_call_operand.vmem [shape: f32[15,30], index: 2, kind: input, shape index: {}]
  %s3 = inlined_call_operand.vmem [shape: f32[30,15], index: 3, kind: input, shape index: {}]
  %s4 = inlined_call_operand.vmem [shape: f32[15,15,50], index: 4, kind: input, shape index: {}]
  %s5 = inlined_call_operand.vmem [shape: f32[1,50], index: 5, kind: input, shape index: {}]
  %s6 = inlined_call_operand.vmem [shape: f32[15,50,15], index: 6, kind: input, shape index: {}]
  %s7 = inlined_call_operand.vmem [shape: f32[15,15], index: 7, kind: input, shape index: {}]
  %s8 = inlined_call_operand.vmem [shape: f32[30,15], index: 8, kind: input, shape index: {}]
  %s9 = inlined_call_operand.vmem [shape: f32[15,30], index: 9, kind: input, shape index: {}]
  %s10 = inlined_call_operand.vmem [shape: f32[30,30], index: 10, kind: output, shape index: {}]
  %s11 = sld [smem:[#allocation0]]
  $region54: #{pixel_encoder_forward.1} parent=0
    _
  %s13 = ssub.s32 1, %s11
  %s14 = scalar_select 0, %s13, %s11
  $region1: #{pixel_encoder_forward.1} parent=0
    #allocation2 [shape = 'u8[512]{0}', space=smem, size = 0x200, scoped, tag = 'input window, operand 1, single buffered']
    #allocation3 [shape = 's32[1]{0}', space=sflag, size = 0x4, scoped, tag = 'scoped memory for pixel_encoder_forward.1']
    %15 = vsyncpa [#allocation3], 0
    // Predicated region
    $region2: #{pixel_encoder_forward.1} parent=1 // pred_check
      _
    $region3: #{pixel_encoder_forward.1} parent=1 // pred_check_branch
      %17 = sbr.rel (0) target = $region5
    $region4: #{pixel_encoder_forward.1} parent=1 // pred_region
      _
    $region5: #{pixel_encoder_forward.1} parent=1 // pred_fallthru
      _
    // Predicated region
    $region6: #{pixel_encoder_forward.1} parent=1 // pred_check
      _
    $region7: #{pixel_encoder_forward.1} parent=1 // pred_check_branch
      %19 = sbr.rel (0) target = $region9
    $region8: #{pixel_encoder_forward.1} parent=1 // pred_region
      %21 = vsyncadd [#allocation3], 0
      %s23 = sshll.u32 %s1, 4
      %s24 = int_to_ptr.vmem [resolvable:$true] %s23
      %26 = dma.vmem_to_smem %s24, 16, [#allocation2], [#allocation3]
    $region9: #{pixel_encoder_forward.1} parent=1 // pred_fallthru
      _
    // Predicated region
    $region10: #{pixel_encoder_forward.1} parent=1 // pred_check
      _
    $region11: #{pixel_encoder_forward.1} parent=1 // pred_check_branch
      %28 = sbr.rel (0) target = $region13
    $region12: #{pixel_encoder_forward.1} parent=1 // pred_region
      _
    $region13: #{pixel_encoder_forward.1} parent=1 // pred_fallthru
      _
    // Predicated region
    $region14: #{pixel_encoder_forward.1} parent=1 // pred_check
      _
    $region15: #{pixel_encoder_forward.1} parent=1 // pred_check_branch
      %30 = sbr.rel (0) target = $region17
    $region16: #{pixel_encoder_forward.1} parent=1 // pred_region
      _
    $region17: #{pixel_encoder_forward.1} parent=1 // pred_fallthru
      _
    // Predicated region
    $region18: #{pixel_encoder_forward.1} parent=1 // pred_check
      _
    $region19: #{pixel_encoder_forward.1} parent=1 // pred_check_branch
      %32 = sbr.rel (0) target = $region21
    $region20: #{pixel_encoder_forward.1} parent=1 // pred_region
      _
    $region21: #{pixel_encoder_forward.1} parent=1 // pred_fallthru
      _
    // Predicated region
    $region22: #{pixel_encoder_forward.1} parent=1 // pred_check
      _
    $region23: #{pixel_encoder_forward.1} parent=1 // pred_check_branch
      %34 = sbr.rel (0) target = $region25
    $region24: #{pixel_encoder_forward.1} parent=1 // pred_region
      _
    $region25: #{pixel_encoder_forward.1} parent=1 // pred_fallthru
      _
    // Predicated region
    $region26: #{pixel_encoder_forward.1} parent=1 // pred_check
      _
    $region27: #{pixel_encoder_forward.1} parent=1 // pred_check_branch
      %36 = sbr.rel (0) target = $region29
    $region28: #{pixel_encoder_forward.1} parent=1 // pred_region
      _
    $region29: #{pixel_encoder_forward.1} parent=1 // pred_fallthru
      _
    // Predicated region
    $region30: #{pixel_encoder_forward.1} parent=1 // pred_check
      _
    $region31: #{pixel_encoder_forward.1} parent=1 // pred_check_branch
      %38 = sbr.rel (0) target = $region33
    $region32: #{pixel_encoder_forward.1} parent=1 // pred_region
      _
    $region33: #{pixel_encoder_forward.1} parent=1 // pred_fallthru
      _
    // Predicated region
    $region34: #{pixel_encoder_forward.1} parent=1 // pred_check
      _
    $region35: #{pixel_encoder_forward.1} parent=1 // pred_check_branch
      %40 = sbr.rel (0) target = $region37
    $region36: #{pixel_encoder_forward.1} parent=1 // pred_region
      _
    $region37: #{pixel_encoder_forward.1} parent=1 // pred_fallthru
      _
    // Predicated region
    $region38: #{pixel_encoder_forward.1} parent=1 // pred_check
      _
    $region39: #{pixel_encoder_forward.1} parent=1 // pred_check_branch
      %42 = sbr.rel (0) target = $region41
    $region40: #{pixel_encoder_forward.1} parent=1 // pred_region
      _
    $region41: #{pixel_encoder_forward.1} parent=1 // pred_fallthru
      _
    // Predicated region
    $region42: #{pixel_encoder_forward.1} parent=1 // pred_check
      _
    $region43: #{pixel_encoder_forward.1} parent=1 // pred_check_branch
      %44 = sbr.rel (0) target = $region45
    $region44: #{pixel_encoder_forward.1} parent=1 // pred_region
      %46 = dma.done [#allocation3], 16
    $region45: #{pixel_encoder_forward.1} parent=1 // pred_fallthru
      _
    %47 = sfence
    %v48 = vld [vmem:[%s0] sm:$0xff]
    %v49 = vld [vmem:[%s0 + $0x8] sm:$0xff]
    %v50 = vld [vmem:[%s0 + $0x10] sm:$0xff]
    %v51 = vld [vmem:[%s0 + $0x18] sm:$0x3f]
    %s52 = sld [smem:[#allocation2]]
    %v53 = vstv %s52
    %v54 = vmul.f32 %v48, %v53
    %v55 = vmul.f32 %v49, %v53
    %v56 = vmul.f32 %v50, %v53
    %v57 = vmul.f32 %v51, %v53
    %v58 = vadd.f32 %v54, 0.0
    %v59 = vadd.f32 %v55, 0.0
    %v60 = vadd.f32 %v56, 0.0
    %v61 = vadd.f32 %v57, 0.0
    %66 = vrot.lane.b32.xlu0 %v48, 127
    %v67 = vpop.permute.xlu0 %66
    %68 = vrot.lane.b32.xlu0 %v49, 127
    %v69 = vpop.permute.xlu0 %68
    %70 = vrot.lane.b32.xlu0 %v50, 127
    %v71 = vpop.permute.xlu0 %70
    %72 = vrot.lane.b32.xlu0 %v51, 127
    %v73 = vpop.permute.xlu0 %72
    %78 = vrot.lane.b32.xlu0 %v48, 29
    %v79 = vpop.permute.xlu0 %78
    %80 = vrot.lane.b32.xlu0 %v49, 29
    %v81 = vpop.permute.xlu0 %80
    %82 = vrot.lane.b32.xlu0 %v50, 29
    %v83 = vpop.permute.xlu0 %82
    %84 = vrot.lane.b32.xlu0 %v51, 29
    %v85 = vpop.permute.xlu0 %84
    %vm90 = vcmask 236544
    %v91 = vsel %vm90, %v67, %v79
    %v92 = vsel %vm90, %v69, %v81
    %v93 = vsel %vm90, %v71, %v83
    %v94 = vsel %vm90, %v73, %v85
    %s95 = sld [smem:[#allocation2 + $0x1]]
    %v96 = vstv %s95
    %v97 = vmul.f32 %v91, %v96
    %v98 = vmul.f32 %v92, %v96
    %v99 = vmul.f32 %v93, %v96
    %v100 = vmul.f32 %v94, %v96
    %v101 = vadd.f32 %v58, %v97
    %v102 = vadd.f32 %v59, %v98
    %v103 = vadd.f32 %v60, %v99
    %v104 = vadd.f32 %v61, %v100
    %105 = vrot.lane.b32.xlu0 %v48, 126
    %v106 = vpop.permute.xlu0 %105
    %107 = vrot.lane.b32.xlu0 %v49, 126
    %v108 = vpop.permute.xlu0 %107
    %109 = vrot.lane.b32.xlu0 %v50, 126
    %v110 = vpop.permute.xlu0 %109
    %111 = vrot.lane.b32.xlu0 %v51, 126
    %v112 = vpop.permute.xlu0 %111
    %117 = vrot.lane.b32.xlu0 %v48, 28
    %v118 = vpop.permute.xlu0 %117
    %119 = vrot.lane.b32.xlu0 %v49, 28
    %v120 = vpop.permute.xlu0 %119
    %121 = vrot.lane.b32.xlu0 %v50, 28
    %v122 = vpop.permute.xlu0 %121
    %123 = vrot.lane.b32.xlu0 %v51, 28
    %v124 = vpop.permute.xlu0 %123
    %vm129 = vcmask 228352
    %v130 = vsel %vm129, %v106, %v118
    %v131 = vsel %vm129, %v108, %v120
    %v132 = vsel %vm129, %v110, %v122
    %v133 = vsel %vm129, %v112, %v124
    %s134 = sld [smem:[#allocation2 + $0x2]]
    %v135 = vstv %s134
    %v136 = vmul.f32 %v130, %v135
    %v137 = vmul.f32 %v131, %v135
    %v138 = vmul.f32 %v132, %v135
    %v139 = vmul.f32 %v133, %v135
    %v140 = vadd.f32 %v101, %v136
    %v141 = vadd.f32 %v102, %v137
    %v142 = vadd.f32 %v103, %v138
    %v143 = vadd.f32 %v104, %v139
    %vm144 = vcmask 1046528
    %v145 = vrot.slane %v48, 1
    %v146 = vrot.slane %v49, 1
    %v147 = vsel %vm144, %v145, %v146
    %v148 = vrot.slane %v50, 1
    %v149 = vsel %vm144, %v146, %v148
    %v150 = vrot.slane %v51, 1
    %v151 = vsel %vm144, %v148, %v150
    %v156 = vrot.slane %v48, 3
    %vm158 = vcmask 1044480
    %v159 = vsel %vm158, %v150, %v156
    %s160 = sld [smem:[#allocation2 + $0x3]]
    %v161 = vstv %s160
    %v162 = vmul.f32 %v147, %v161
    %v163 = vmul.f32 %v149, %v161
    %v164 = vmul.f32 %v151, %v161
    %v165 = vmul.f32 %v159, %v161
    %v166 = vadd.f32 %v140, %v162
    %v167 = vadd.f32 %v141, %v163
    %v168 = vadd.f32 %v142, %v164
    %v169 = vadd.f32 %v143, %v165
    %171 = vrot.lane.b32.xlu0 %v147, 127
    %v172 = vpop.permute.xlu0 %171
    %173 = vrot.lane.b32.xlu0 %v149, 127
    %v174 = vpop.permute.xlu0 %173
    %175 = vrot.lane.b32.xlu0 %v151, 127
    %v176 = vpop.permute.xlu0 %175
    %177 = vrot.lane.b32.xlu0 %v159, 127
    %v178 = vpop.permute.xlu0 %177
    %183 = vrot.lane.b32.xlu0 %v147, 29
    %v184 = vpop.permute.xlu0 %183
    %185 = vrot.lane.b32.xlu0 %v149, 29
    %v186 = vpop.permute.xlu0 %185
    %187 = vrot.lane.b32.xlu0 %v151, 29
    %v188 = vpop.permute.xlu0 %187
    %189 = vrot.lane.b32.xlu0 %v159, 29
    %v190 = vpop.permute.xlu0 %189
    %v195 = vsel %vm90, %v172, %v184
    %v196 = vsel %vm90, %v174, %v186
    %v197 = vsel %vm90, %v176, %v188
    %v198 = vsel %vm90, %v178, %v190
    %s199 = sld [smem:[#allocation2 + $0x4]]
    %v200 = vstv %s199
    %v201 = vmul.f32 %v195, %v200
    %v202 = vmul.f32 %v196, %v200
    %v203 = vmul.f32 %v197, %v200
    %v204 = vmul.f32 %v198, %v200
    %v205 = vadd.f32 %v166, %v201
    %v206 = vadd.f32 %v167, %v202
    %v207 = vadd.f32 %v168, %v203
    %v208 = vadd.f32 %v169, %v204
    %209 = vrot.lane.b32.xlu0 %v147, 126
    %v210 = vpop.permute.xlu0 %209
    %211 = vrot.lane.b32.xlu0 %v149, 126
    %v212 = vpop.permute.xlu0 %211
    %213 = vrot.lane.b32.xlu0 %v151, 126
    %v214 = vpop.permute.xlu0 %213
    %215 = vrot.lane.b32.xlu0 %v159, 126
    %v216 = vpop.permute.xlu0 %215
    %221 = vrot.lane.b32.xlu0 %v147, 28
    %v222 = vpop.permute.xlu0 %221
    %223 = vrot.lane.b32.xlu0 %v149, 28
    %v224 = vpop.permute.xlu0 %223
    %225 = vrot.lane.b32.xlu0 %v151, 28
    %v226 = vpop.permute.xlu0 %225
    %227 = vrot.lane.b32.xlu0 %v159, 28
    %v228 = vpop.permute.xlu0 %227
    %v233 = vsel %vm129, %v210, %v222
    %v234 = vsel %vm129, %v212, %v224
    %v235 = vsel %vm129, %v214, %v226
    %v236 = vsel %vm129, %v216, %v228
    %s237 = sld [smem:[#allocation2 + $0x5]]
    %v238 = vstv %s237
    %v239 = vmul.f32 %v233, %v238
    %v240 = vmul.f32 %v234, %v238
    %v241 = vmul.f32 %v235, %v238
    %v242 = vmul.f32 %v236, %v238
    %v243 = vadd.f32 %v205, %v239
    %v244 = vadd.f32 %v206, %v240
    %v245 = vadd.f32 %v207, %v241
    %v246 = vadd.f32 %v208, %v242
    %vm247 = vcmask 1045504
    %v248 = vrot.slane %v48, 2
    %v249 = vrot.slane %v49, 2
    %v250 = vsel %vm247, %v248, %v249
    %v251 = vrot.slane %v50, 2
    %v252 = vsel %vm247, %v249, %v251
    %v253 = vrot.slane %v51, 2
    %v254 = vsel %vm247, %v251, %v253
    %v259 = vrot.slane %v48, 4
    %vm261 = vcmask 1043456
    %v262 = vsel %vm261, %v253, %v259
    %s263 = sld [smem:[#allocation2 + $0x6]]
    %v264 = vstv %s263
    %v265 = vmul.f32 %v250, %v264
    %v266 = vmul.f32 %v252, %v264
    %v267 = vmul.f32 %v254, %v264
    %v268 = vmul.f32 %v262, %v264
    %v269 = vadd.f32 %v243, %v265
    %v270 = vadd.f32 %v244, %v266
    %v271 = vadd.f32 %v245, %v267
    %v272 = vadd.f32 %v246, %v268
    %274 = vrot.lane.b32.xlu0 %v250, 127
    %v275 = vpop.permute.xlu0 %274
    %276 = vrot.lane.b32.xlu0 %v252, 127
    %v277 = vpop.permute.xlu0 %276
    %278 = vrot.lane.b32.xlu0 %v254, 127
    %v279 = vpop.permute.xlu0 %278
    %280 = vrot.lane.b32.xlu0 %v262, 127
    %v281 = vpop.permute.xlu0 %280
    %286 = vrot.lane.b32.xlu0 %v250, 29
    %v287 = vpop.permute.xlu0 %286
    %288 = vrot.lane.b32.xlu0 %v252, 29
    %v289 = vpop.permute.xlu0 %288
    %290 = vrot.lane.b32.xlu0 %v254, 29
    %v291 = vpop.permute.xlu0 %290
    %292 = vrot.lane.b32.xlu0 %v262, 29
    %v293 = vpop.permute.xlu0 %292
    %v298 = vsel %vm90, %v275, %v287
    %v299 = vsel %vm90, %v277, %v289
    %v300 = vsel %vm90, %v279, %v291
    %v301 = vsel %vm90, %v281, %v293
    %s302 = sld [smem:[#allocation2 + $0x7]]
    %v303 = vstv %s302
    %v304 = vmul.f32 %v298, %v303
    %v305 = vmul.f32 %v299, %v303
    %v306 = vmul.f32 %v300, %v303
    %v307 = vmul.f32 %v301, %v303
    %v308 = vadd.f32 %v269, %v304
    %v309 = vadd.f32 %v270, %v305
    %v310 = vadd.f32 %v271, %v306
    %v311 = vadd.f32 %v272, %v307
    %312 = vrot.lane.b32.xlu0 %v250, 126
    %v313 = vpop.permute.xlu0 %312
    %314 = vrot.lane.b32.xlu0 %v252, 126
    %v315 = vpop.permute.xlu0 %314
    %316 = vrot.lane.b32.xlu0 %v254, 126
    %v317 = vpop.permute.xlu0 %316
    %318 = vrot.lane.b32.xlu0 %v262, 126
    %v319 = vpop.permute.xlu0 %318
    %324 = vrot.lane.b32.xlu0 %v250, 28
    %v325 = vpop.permute.xlu0 %324
    %326 = vrot.lane.b32.xlu0 %v252, 28
    %v327 = vpop.permute.xlu0 %326
    %328 = vrot.lane.b32.xlu0 %v254, 28
    %v329 = vpop.permute.xlu0 %328
    %330 = vrot.lane.b32.xlu0 %v262, 28
    %v331 = vpop.permute.xlu0 %330
    %v336 = vsel %vm129, %v313, %v325
    %v337 = vsel %vm129, %v315, %v327
    %v338 = vsel %vm129, %v317, %v329
    %v339 = vsel %vm129, %v319, %v331
    %s340 = sld [smem:[#allocation2 + $0x8]]
    %v341 = vstv %s340
    %v342 = vmul.f32 %v336, %v341
    %v343 = vmul.f32 %v337, %v341
    %v344 = vmul.f32 %v338, %v341
    %v345 = vmul.f32 %v339, %v341
    %v346 = vadd.f32 %v308, %v342
    %v347 = vadd.f32 %v309, %v343
    %v348 = vadd.f32 %v310, %v344
    %v349 = vadd.f32 %v311, %v345
    %s350 = sld [smem:[#allocation2 + $0x9]]
    %v351 = vstv %s350
    %v352 = vadd.f32 %v346, %v351
    %v353 = vadd.f32 %v347, %v351
    %v354 = vadd.f32 %v348, %v351
    %v355 = vadd.f32 %v349, %v351
    %v356 = vlaneseq
    %v357 = vshrl.u32 %v356, 7
    %v358 = vadd.s32 %v357, 8
    %v359 = vadd.s32 %v357, 16
    %v360 = vadd.s32 %v357, 24
    %v361 = vlaneseq
    %v362 = vand.u32 %v361, 127
    %vm363 = vcmp.lt.s32.totalorder %v357, 28
    %vm364 = vcmp.lt.s32.totalorder %v358, 28
    %vm365 = vcmp.lt.s32.totalorder %v359, 28
    %vm366 = vcmp.lt.s32.totalorder %v360, 28
    %vm367 = vcmp.lt.s32.totalorder %v362, 28
    %vm368 = vmand %vm363, %vm367
    %vm369 = vmand %vm364, %vm367
    %vm370 = vmand %vm365, %vm367
    %vm371 = vmand %vm366, %vm367
    %vm372 = vcmp.lt.s32.totalorder %v357, 0
    %v373 = vsub.s32 0, %v357
    %v374 = vsel %vm372, %v373, %v357
    %v375 = vshrl.u32 %v374, 1
    %v376 = vand.u32 %v374, 1
    %v377 = vsub.s32 0, %v376
    %v378 = vsel %vm372, %v377, %v376
    %vm379 = vcmp.lt.s32.totalorder %v358, 0
    %v380 = vsub.s32 0, %v358
    %v381 = vsel %vm379, %v380, %v358
    %v382 = vshrl.u32 %v381, 1
    %v383 = vand.u32 %v381, 1
    %v384 = vsub.s32 0, %v383
    %v385 = vsel %vm379, %v384, %v383
    %vm386 = vcmp.lt.s32.totalorder %v359, 0
    %v387 = vsub.s32 0, %v359
    %v388 = vsel %vm386, %v387, %v359
    %v389 = vshrl.u32 %v388, 1
    %v390 = vand.u32 %v388, 1
    %v391 = vsub.s32 0, %v390
    %v392 = vsel %vm386, %v391, %v390
    %vm393 = vcmp.lt.s32.totalorder %v360, 0
    %v394 = vsub.s32 0, %v360
    %v395 = vsel %vm393, %v394, %v360
    %v396 = vshrl.u32 %v395, 1
    %v397 = vand.u32 %v395, 1
    %v398 = vsub.s32 0, %v397
    %v399 = vsel %vm393, %v398, %v397
    %vm400 = vcmp.ne.s32.totalorder %v378, 0
    %vm401 = vcmp.ne.s32.totalorder %v385, 0
    %vm402 = vcmp.ne.s32.totalorder %v392, 0
    %vm403 = vcmp.ne.s32.totalorder %v399, 0
    %vm404 = vcmp.lt.s32.totalorder %v378, 0
    %vm405 = vcmp.lt.s32.totalorder %v385, 0
    %vm406 = vcmp.lt.s32.totalorder %v392, 0
    %vm407 = vcmp.lt.s32.totalorder %v399, 0
    %vm408 = vmand %vm404, %vm400
    %vm409 = vmand %vm405, %vm401
    %vm410 = vmand %vm406, %vm402
    %vm411 = vmand %vm407, %vm403
    %v412 = vadd.s32 %v378, 2
    %v413 = vadd.s32 %v385, 2
    %v414 = vadd.s32 %v392, 2
    %v415 = vadd.s32 %v399, 2
    %v416 = vsel %vm408, %v412, %v378
    %v417 = vsel %vm409, %v413, %v385
    %v418 = vsel %vm410, %v414, %v392
    %v419 = vsel %vm411, %v415, %v399
    %vm420 = vcmp.eq.s32.totalorder %v416, 1
    %vm421 = vcmp.eq.s32.totalorder %v417, 1
    %vm422 = vcmp.eq.s32.totalorder %v418, 1
    %vm423 = vcmp.eq.s32.totalorder %v419, 1
    %vm424 = vcmp.lt.s32.totalorder %v362, 0
    %v425 = vsub.s32 0, %v362
    %v426 = vsel %vm424, %v425, %v362
    %v427 = vshrl.u32 %v426, 1
    %v428 = vand.u32 %v426, 1
    %v429 = vsub.s32 0, %v428
    %v430 = vsel %vm424, %v429, %v428
    %vm431 = vcmp.ne.s32.totalorder %v430, 0
    %vm432 = vcmp.lt.s32.totalorder %v430, 0
    %vm433 = vmand %vm432, %vm431
    %v434 = vadd.s32 %v430, 2
    %v435 = vsel %vm433, %v434, %v430
    %vm436 = vcmp.eq.s32.totalorder %v435, 1
    %v437 = vsel %vm368, %v352, -1e+30
    %v438 = vsel %vm369, %v353, -1e+30
    %v439 = vsel %vm370, %v354, -1e+30
    %v440 = vsel %vm371, %v355, -1e+30
    %v442 = vrot.slane %v440, 5
    %vm447 = vcmask 1040384
    %v448 = vrot.slane %v437, 7
    %v449 = vrot.slane %v438, 7
    %v450 = vsel %vm447, %v448, %v449
    %v451 = vrot.slane %v439, 7
    %v452 = vsel %vm447, %v449, %v451
    %v453 = vrot.slane %v440, 7
    %v454 = vsel %vm447, %v451, %v453
    %v459 = vsel %vm447, %v442, %v448
    %v460 = vrot.slane %v437, 1
    %v461 = vrot.slane %v438, 1
    %v462 = vsel %vm144, %v460, %v461
    %v463 = vrot.slane %v439, 1
    %v464 = vsel %vm144, %v461, %v463
    %v465 = vrot.slane %v440, 1
    %v466 = vsel %vm144, %v463, %v465
    %v471 = vrot.slane %v437, 3
    %v473 = vsel %vm158, %v465, %v471
    %474 = vrot.lane.b32.xlu0 %v437, 99
    %v475 = vpop.permute.xlu0 %474
    %476 = vrot.lane.b32.xlu0 %v438, 99
    %v477 = vpop.permute.xlu0 %476
    %478 = vrot.lane.b32.xlu0 %v439, 99
    %v479 = vpop.permute.xlu0 %478
    %480 = vrot.lane.b32.xlu0 %v440, 99
    %v481 = vpop.permute.xlu0 %480
    %486 = vrot.lane.b32.xlu0 %v437, 1
    %v487 = vpop.permute.xlu0 %486
    %488 = vrot.lane.b32.xlu0 %v438, 1
    %v489 = vpop.permute.xlu0 %488
    %490 = vrot.lane.b32.xlu0 %v439, 1
    %v491 = vpop.permute.xlu0 %490
    %492 = vrot.lane.b32.xlu0 %v440, 1
    %v493 = vpop.permute.xlu0 %492
    %vm498 = vcmask 7168
    %v499 = vsel %vm498, %v475, %v487
    %v500 = vsel %vm498, %v477, %v489
    %v501 = vsel %vm498, %v479, %v491
    %v502 = vsel %vm498, %v481, %v493
    %503 = vrot.lane.b32.xlu0 %v437, 127
    %v504 = vpop.permute.xlu0 %503
    %505 = vrot.lane.b32.xlu0 %v438, 127
    %v506 = vpop.permute.xlu0 %505
    %507 = vrot.lane.b32.xlu0 %v439, 127
    %v508 = vpop.permute.xlu0 %507
    %509 = vrot.lane.b32.xlu0 %v440, 127
    %v510 = vpop.permute.xlu0 %509
    %515 = vrot.lane.b32.xlu0 %v437, 29
    %v516 = vpop.permute.xlu0 %515
    %517 = vrot.lane.b32.xlu0 %v438, 29
    %v518 = vpop.permute.xlu0 %517
    %519 = vrot.lane.b32.xlu0 %v439, 29
    %v520 = vpop.permute.xlu0 %519
    %521 = vrot.lane.b32.xlu0 %v440, 29
    %v522 = vpop.permute.xlu0 %521
    %v527 = vsel %vm90, %v504, %v516
    %v528 = vsel %vm90, %v506, %v518
    %v529 = vsel %vm90, %v508, %v520
    %v530 = vsel %vm90, %v510, %v522
    %532 = vrot.lane.b32.xlu0 %v459, 99
    %v533 = vpop.permute.xlu0 %532
    %534 = vrot.lane.b32.xlu0 %v450, 99
    %v535 = vpop.permute.xlu0 %534
    %536 = vrot.lane.b32.xlu0 %v452, 99
    %v537 = vpop.permute.xlu0 %536
    %538 = vrot.lane.b32.xlu0 %v454, 99
    %v539 = vpop.permute.xlu0 %538
    %544 = vrot.lane.b32.xlu0 %v459, 1
    %v545 = vpop.permute.xlu0 %544
    %546 = vrot.lane.b32.xlu0 %v450, 1
    %v547 = vpop.permute.xlu0 %546
    %548 = vrot.lane.b32.xlu0 %v452, 1
    %v549 = vpop.permute.xlu0 %548
    %550 = vrot.lane.b32.xlu0 %v454, 1
    %v551 = vpop.permute.xlu0 %550
    %v556 = vsel %vm498, %v533, %v545
    %v557 = vsel %vm498, %v535, %v547
    %v558 = vsel %vm498, %v537, %v549
    %v559 = vsel %vm498, %v539, %v551
    %560 = vrot.lane.b32.xlu0 %v459, 127
    %v561 = vpop.permute.xlu0 %560
    %562 = vrot.lane.b32.xlu0 %v450, 127
    %v563 = vpop.permute.xlu0 %562
    %564 = vrot.lane.b32.xlu0 %v452, 127
    %v565 = vpop.permute.xlu0 %564
    %566 = vrot.lane.b32.xlu0 %v454, 127
    %v567 = vpop.permute.xlu0 %566
    %572 = vrot.lane.b32.xlu0 %v459, 29
    %v573 = vpop.permute.xlu0 %572
    %574 = vrot.lane.b32.xlu0 %v450, 29
    %v575 = vpop.permute.xlu0 %574
    %576 = vrot.lane.b32.xlu0 %v452, 29
    %v577 = vpop.permute.xlu0 %576
    %578 = vrot.lane.b32.xlu0 %v454, 29
    %v579 = vpop.permute.xlu0 %578
    %v584 = vsel %vm90, %v561, %v573
    %v585 = vsel %vm90, %v563, %v575
    %v586 = vsel %vm90, %v565, %v577
    %v587 = vsel %vm90, %v567, %v579
    %589 = vrot.lane.b32.xlu0 %v462, 99
    %v590 = vpop.permute.xlu0 %589
    %591 = vrot.lane.b32.xlu0 %v464, 99
    %v592 = vpop.permute.xlu0 %591
    %593 = vrot.lane.b32.xlu0 %v466, 99
    %v594 = vpop.permute.xlu0 %593
    %595 = vrot.lane.b32.xlu0 %v473, 99
    %v596 = vpop.permute.xlu0 %595
    %601 = vrot.lane.b32.xlu0 %v462, 1
    %v602 = vpop.permute.xlu0 %601
    %603 = vrot.lane.b32.xlu0 %v464, 1
    %v604 = vpop.permute.xlu0 %603
    %605 = vrot.lane.b32.xlu0 %v466, 1
    %v606 = vpop.permute.xlu0 %605
    %607 = vrot.lane.b32.xlu0 %v473, 1
    %v608 = vpop.permute.xlu0 %607
    %v613 = vsel %vm498, %v590, %v602
    %v614 = vsel %vm498, %v592, %v604
    %v615 = vsel %vm498, %v594, %v606
    %v616 = vsel %vm498, %v596, %v608
    %617 = vrot.lane.b32.xlu0 %v462, 127
    %v618 = vpop.permute.xlu0 %617
    %619 = vrot.lane.b32.xlu0 %v464, 127
    %v620 = vpop.permute.xlu0 %619
    %621 = vrot.lane.b32.xlu0 %v466, 127
    %v622 = vpop.permute.xlu0 %621
    %623 = vrot.lane.b32.xlu0 %v473, 127
    %v624 = vpop.permute.xlu0 %623
    %629 = vrot.lane.b32.xlu0 %v462, 29
    %v630 = vpop.permute.xlu0 %629
    %631 = vrot.lane.b32.xlu0 %v464, 29
    %v632 = vpop.permute.xlu0 %631
    %633 = vrot.lane.b32.xlu0 %v466, 29
    %v634 = vpop.permute.xlu0 %633
    %635 = vrot.lane.b32.xlu0 %v473, 29
    %v636 = vpop.permute.xlu0 %635
    %v641 = vsel %vm90, %v618, %v630
    %v642 = vsel %vm90, %v620, %v632
    %v643 = vsel %vm90, %v622, %v634
    %v644 = vsel %vm90, %v624, %v636
    %v645 = vsel %vm420, %v462, %v459
    %v646 = vsel %vm421, %v464, %v450
    %v647 = vsel %vm422, %v466, %v452
    %v648 = vsel %vm423, %v473, %v454
    %v649 = vsel %vm436, %v527, %v499
    %v650 = vsel %vm436, %v528, %v500
    %v651 = vsel %vm436, %v529, %v501
    %v652 = vsel %vm436, %v530, %v502
    %v653 = vsel %vm436, %v641, %v613
    %v654 = vsel %vm436, %v642, %v614
    %v655 = vsel %vm436, %v643, %v615
    %v656 = vsel %vm436, %v644, %v616
    %v657 = vsel %vm436, %v584, %v556
    %v658 = vsel %vm436, %v585, %v557
    %v659 = vsel %vm436, %v586, %v558
    %v660 = vsel %vm436, %v587, %v559
    %v661 = vsel %vm420, %v653, %v657
    %v662 = vsel %vm421, %v654, %v658
    %v663 = vsel %vm422, %v655, %v659
    %v664 = vsel %vm423, %v656, %v660
    %v665 = vmax.f32 %v437, %v645
    %v666 = vmax.f32 %v438, %v646
    %v667 = vmax.f32 %v439, %v647
    %v668 = vmax.f32 %v440, %v648
    %v669 = vmax.f32 %v649, %v661
    %v670 = vmax.f32 %v650, %v662
    %v671 = vmax.f32 %v651, %v663
    %v672 = vmax.f32 %v652, %v664
    %v673 = vmax.f32 %v665, %v669
    %v674 = vmax.f32 %v666, %v670
    %v675 = vmax.f32 %v667, %v671
    %v676 = vmax.f32 %v668, %v672
    %vm677 = vcmp.gt.f32.partialorder %v437, %v645
    %vm678 = vcmp.gt.f32.partialorder %v438, %v646
    %vm679 = vcmp.gt.f32.partialorder %v439, %v647
    %vm680 = vcmp.gt.f32.partialorder %v440, %v648
    %vm681 = vcmp.eq.f32.partialorder %v437, %v645
    %vm682 = vcmp.eq.f32.partialorder %v438, %v646
    %vm683 = vcmp.eq.f32.partialorder %v439, %v647
    %vm684 = vcmp.eq.f32.partialorder %v440, %v648
    %vm685 = vmand %vm420, %vm681
    %vm686 = vmand %vm421, %vm682
    %vm687 = vmand %vm422, %vm683
    %vm688 = vmand %vm423, %vm684
    %vm689 = vmor %vm677, %vm685
    %vm690 = vmor %vm678, %vm686
    %vm691 = vmor %vm679, %vm687
    %vm692 = vmor %vm680, %vm688
    %vm693 = vcmp.gt.f32.partialorder %v437, %v661
    %vm694 = vcmp.gt.f32.partialorder %v438, %v662
    %vm695 = vcmp.gt.f32.partialorder %v439, %v663
    %vm696 = vcmp.gt.f32.partialorder %v440, %v664
    %vm697 = vcmp.eq.f32.partialorder %v437, %v661
    %vm698 = vcmp.eq.f32.partialorder %v438, %v662
    %vm699 = vcmp.eq.f32.partialorder %v439, %v663
    %vm700 = vcmp.eq.f32.partialorder %v440, %v664
    %vm701 = vmand %vm420, %vm697
    %vm702 = vmand %vm421, %vm698
    %vm703 = vmand %vm422, %vm699
    %vm704 = vmand %vm423, %vm700
    %vm705 = vmor %vm693, %vm701
    %vm706 = vmor %vm694, %vm702
    %vm707 = vmor %vm695, %vm703
    %vm708 = vmor %vm696, %vm704
    %vm709 = vcmp.gt.f32.partialorder %v437, %v649
    %vm710 = vcmp.gt.f32.partialorder %v438, %v650
    %vm711 = vcmp.gt.f32.partialorder %v439, %v651
    %vm712 = vcmp.gt.f32.partialorder %v440, %v652
    %vm713 = vcmp.eq.f32.partialorder %v437, %v649
    %vm714 = vcmp.eq.f32.partialorder %v438, %v650
    %vm715 = vcmp.eq.f32.partialorder %v439, %v651
    %vm716 = vcmp.eq.f32.partialorder %v440, %v652
    %vm717 = vmand %vm436, %vm713
    %vm718 = vmand %vm436, %vm714
    %vm719 = vmand %vm436, %vm715
    %vm720 = vmand %vm436, %vm716
    %vm721 = vmor %vm709, %vm717
    %vm722 = vmor %vm710, %vm718
    %vm723 = vmor %vm711, %vm719
    %vm724 = vmor %vm712, %vm720
    %vm725 = vmand %vm689, %vm705
    %vm726 = vmand %vm690, %vm706
    %vm727 = vmand %vm691, %vm707
    %vm728 = vmand %vm692, %vm708
    %vm729 = vmand %vm725, %vm721
    %vm730 = vmand %vm726, %vm722
    %vm731 = vmand %vm727, %vm723
    %vm732 = vmand %vm728, %vm724
    %vm733 = vmand %vm729, %vm368
    %vm734 = vmand %vm730, %vm369
    %vm735 = vmand %vm731, %vm370
    %vm736 = vmand %vm732, %vm371
    %v737 = vld [vmem:[%s2] sm:$0xff]
    %v738 = vld [vmem:[%s2 + $0x8] sm:$0x7f]
    %vm739 = vcmask 244736
    %v741 = vsel %vm739, %v737, 0
    %v744 = vsel %vm739, %v738, 0
    %v747 = vsel %vm247, %v676, 0
    %749 = vmatpush.msra.mxu0 0.0
    %750 = vmatpush.msra.mxu0 0.0
    %751 = vmatpush.msra.mxu0 0.0
    %752 = vmatpush.msra.mxu0 0.0
    %753 = vmatpush.msra.mxu0 0.0
    %754 = vmatpush.msra.mxu0 0.0
    %755 = vmatpush.msra.mxu0 0.0
    %756 = vmatpush.msra.mxu0 0.0
    %757 = vmatpush.msra.mxu0 0.0
    %758 = vmatpush.msra.mxu0 0.0
    %759 = vmatpush.msra.mxu0 0.0
    %760 = vmatpush.msra.mxu0 0.0
    %761 = vmatpush.msra.mxu0 %v747
    %762 = vmatpush.msra.mxu0 %v675
    %763 = vmatpush.msra.mxu0 %v674
    %764 = vmatpush.msra.mxu0 %v673
    %765 = vmatmul.f32.gmra.mxu0 %v741
    %v766 = vpop.f32.mrf.mxu0
    %v767 = vadd.f32 0.0, %v766
    %768 = vmatmul.f32.gmra.mxu0 %v744
    %v769 = vpop.f32.mrf.mxu0
    %v770 = vadd.f32 0.0, %v769
    %771 = vdwg.mxu0
    %v772 = vld [vmem:[%s3] sm:$0xff]
    %v773 = vld [vmem:[%s3 + $0x8] sm:$0xff]
    %v774 = vld [vmem:[%s3 + $0x10] sm:$0xff]
    %v775 = vld [vmem:[%s3 + $0x18] sm:$0x3f]
    %v777 = vsel %vm739, %v767, 0
    %v780 = vsel %vm739, %v770, 0
    %v783 = vsel %vm247, %v775, 0
    %785 = vmatpush.msra.mxu0 0.0
    %786 = vmatpush.msra.mxu0 0.0
    %787 = vmatpush.msra.mxu0 0.0
    %788 = vmatpush.msra.mxu0 0.0
    %789 = vmatpush.msra.mxu0 0.0
    %790 = vmatpush.msra.mxu0 0.0
    %791 = vmatpush.msra.mxu0 0.0
    %792 = vmatpush.msra.mxu0 0.0
    %793 = vmatpush.msra.mxu0 0.0
    %794 = vmatpush.msra.mxu0 0.0
    %795 = vmatpush.msra.mxu0 0.0
    %796 = vmatpush.msra.mxu0 0.0
    %797 = vmatpush.msra.mxu0 %v783
    %798 = vmatpush.msra.mxu0 %v774
    %799 = vmatpush.msra.mxu0 %v773
    %800 = vmatpush.msra.mxu0 %v772
    %801 = vmatmul.f32.gmra.mxu0 %v777
    %v802 = vpop.f32.mrf.mxu0
    %v803 = vadd.f32 0.0, %v802
    %804 = vmatmul.f32.gmra.mxu0 %v780
    %v805 = vpop.f32.mrf.mxu0
    %v806 = vadd.f32 0.0, %v805
    %807 = vdwg.mxu0
    %v808 = vld [vmem:[%s5] sm:$0x1]
    %v809 = vld [vmem:[%s4] sm:$0xff]
    %v810 = vld [vmem:[%s4 + $0x8] sm:$0x7f]
    %vm811 = vcmask 121856
    %v813 = vsel %vm811, %v803, 0
    %v816 = vsel %vm144, %v810, 0
    %818 = vmatpush.msra.mxu0 0.0
    %819 = vmatpush.msra.mxu0 0.0
    %820 = vmatpush.msra.mxu0 0.0
    %821 = vmatpush.msra.mxu0 0.0
    %822 = vmatpush.msra.mxu0 0.0
    %823 = vmatpush.msra.mxu0 0.0
    %824 = vmatpush.msra.mxu0 0.0
    %825 = vmatpush.msra.mxu0 0.0
    %826 = vmatpush.msra.mxu0 0.0
    %827 = vmatpush.msra.mxu0 0.0
    %828 = vmatpush.msra.mxu0 0.0
    %829 = vmatpush.msra.mxu0 0.0
    %830 = vmatpush.msra.mxu0 0.0
    %831 = vmatpush.msra.mxu0 0.0
    %832 = vmatpush.msra.mxu0 %v816
    %833 = vmatpush.msra.mxu0 %v809
    %834 = vmatmul.f32.gmra.mxu0 %v813
    %v835 = vpop.f32.mrf.mxu0
    %v836 = vadd.f32 0.0, %v835
    %837 = vdwg.mxu0
    %v838 = vadd.f32 %v808, %v836
    %s839 = scalar_lea.vmem %s4, 16
    %v840 = vld [vmem:[%s839] sm:$0xff]
    %v841 = vld [vmem:[%s839 + $0x8] sm:$0x7f]
    %v842 = vrot.slane %v803, 1
    %v843 = vsel %vm811, %v842, 0
    %v846 = vsel %vm144, %v841, 0
    %848 = vmatpush.msra.mxu0 0.0
    %849 = vmatpush.msra.mxu0 0.0
    %850 = vmatpush.msra.mxu0 0.0
    %851 = vmatpush.msra.mxu0 0.0
    %852 = vmatpush.msra.mxu0 0.0
    %853 = vmatpush.msra.mxu0 0.0
    %854 = vmatpush.msra.mxu0 0.0
    %855 = vmatpush.msra.mxu0 0.0
    %856 = vmatpush.msra.mxu0 0.0
    %857 = vmatpush.msra.mxu0 0.0
    %858 = vmatpush.msra.mxu0 0.0
    %859 = vmatpush.msra.mxu0 0.0
    %860 = vmatpush.msra.mxu0 0.0
    %861 = vmatpush.msra.mxu0 0.0
    %862 = vmatpush.msra.mxu0 %v846
    %863 = vmatpush.msra.mxu0 %v840
    %864 = vmatmul.f32.gmra.mxu0 %v843
    %v865 = vpop.f32.mrf.mxu0
    %v866 = vadd.f32 0.0, %v865
    %867 = vdwg.mxu0
    %v868 = vadd.f32 %v838, %v866
    %s869 = scalar_lea.vmem %s4, 32
    %v870 = vld [vmem:[%s869] sm:$0xff]
    %v871 = vld [vmem:[%s869 + $0x8] sm:$0x7f]
    %v872 = vrot.slane %v803, 2
    %v873 = vsel %vm811, %v872, 0
    %v876 = vsel %vm144, %v871, 0
    %878 = vmatpush.msra.mxu0 0.0
    %879 = vmatpush.msra.mxu0 0.0
    %880 = vmatpush.msra.mxu0 0.0
    %881 = vmatpush.msra.mxu0 0.0
    %882 = vmatpush.msra.mxu0 0.0
    %883 = vmatpush.msra.mxu0 0.0
    %884 = vmatpush.msra.mxu0 0.0
    %885 = vmatpush.msra.mxu0 0.0
    %886 = vmatpush.msra.mxu0 0.0
    %887 = vmatpush.msra.mxu0 0.0
    %888 = vmatpush.msra.mxu0 0.0
    %889 = vmatpush.msra.mxu0 0.0
    %890 = vmatpush.msra.mxu0 0.0
    %891 = vmatpush.msra.mxu0 0.0
    %892 = vmatpush.msra.mxu0 %v876
    %893 = vmatpush.msra.mxu0 %v870
    %894 = vmatmul.f32.gmra.mxu0 %v873
    %v895 = vpop.f32.mrf.mxu0
    %v896 = vadd.f32 0.0, %v895
    %897 = vdwg.mxu0
    %v898 = vadd.f32 %v868, %v896
    %s899 = scalar_lea.vmem %s4, 48
    %v900 = vld [vmem:[%s899] sm:$0xff]
    %v901 = vld [vmem:[%s899 + $0x8] sm:$0x7f]
    %v902 = vrot.slane %v803, 3
    %v903 = vsel %vm811, %v902, 0
    %v906 = vsel %vm144, %v901, 0
    %908 = vmatpush.msra.mxu0 0.0
    %909 = vmatpush.msra.mxu0 0.0
    %910 = vmatpush.msra.mxu0 0.0
    %911 = vmatpush.msra.mxu0 0.0
    %912 = vmatpush.msra.mxu0 0.0
    %913 = vmatpush.msra.mxu0 0.0
    %914 = vmatpush.msra.mxu0 0.0
    %915 = vmatpush.msra.mxu0 0.0
    %916 = vmatpush.msra.mxu0 0.0
    %917 = vmatpush.msra.mxu0 0.0
    %918 = vmatpush.msra.mxu0 0.0
    %919 = vmatpush.msra.mxu0 0.0
    %920 = vmatpush.msra.mxu0 0.0
    %921 = vmatpush.msra.mxu0 0.0
    %922 = vmatpush.msra.mxu0 %v906
    %923 = vmatpush.msra.mxu0 %v900
    %924 = vmatmul.f32.gmra.mxu0 %v903
    %v925 = vpop.f32.mrf.mxu0
    %v926 = vadd.f32 0.0, %v925
    %927 = vdwg.mxu0
    %v928 = vadd.f32 %v898, %v926
    %s929 = scalar_lea.vmem %s4, 64
    %v930 = vld [vmem:[%s929] sm:$0xff]
    %v931 = vld [vmem:[%s929 + $0x8] sm:$0x7f]
    %v932 = vrot.slane %v803, 4
    %v933 = vsel %vm811, %v932, 0
    %v936 = vsel %vm144, %v931, 0
    %938 = vmatpush.msra.mxu0 0.0
    %939 = vmatpush.msra.mxu0 0.0
    %940 = vmatpush.msra.mxu0 0.0
    %941 = vmatpush.msra.mxu0 0.0
    %942 = vmatpush.msra.mxu0 0.0
    %943 = vmatpush.msra.mxu0 0.0
    %944 = vmatpush.msra.mxu0 0.0
    %945 = vmatpush.msra.mxu0 0.0
    %946 = vmatpush.msra.mxu0 0.0
    %947 = vmatpush.msra.mxu0 0.0
    %948 = vmatpush.msra.mxu0 0.0
    %949 = vmatpush.msra.mxu0 0.0
    %950 = vmatpush.msra.mxu0 0.0
    %951 = vmatpush.msra.mxu0 0.0
    %952 = vmatpush.msra.mxu0 %v936
    %953 = vmatpush.msra.mxu0 %v930
    %954 = vmatmul.f32.gmra.mxu0 %v933
    %v955 = vpop.f32.mrf.mxu0
    %v956 = vadd.f32 0.0, %v955
    %957 = vdwg.mxu0
    %v958 = vadd.f32 %v928, %v956
    %s959 = scalar_lea.vmem %s4, 80
    %v960 = vld [vmem:[%s959] sm:$0xff]
    %v961 = vld [vmem:[%s959 + $0x8] sm:$0x7f]
    %v962 = vrot.slane %v803, 5
    %v963 = vsel %vm811, %v962, 0
    %v966 = vsel %vm144, %v961, 0
    %968 = vmatpush.msra.mxu0 0.0
    %969 = vmatpush.msra.mxu0 0.0
    %970 = vmatpush.msra.mxu0 0.0
    %971 = vmatpush.msra.mxu0 0.0
    %972 = vmatpush.msra.mxu0 0.0
    %973 = vmatpush.msra.mxu0 0.0
    %974 = vmatpush.msra.mxu0 0.0
    %975 = vmatpush.msra.mxu0 0.0
    %976 = vmatpush.msra.mxu0 0.0
    %977 = vmatpush.msra.mxu0 0.0
    %978 = vmatpush.msra.mxu0 0.0
    %979 = vmatpush.msra.mxu0 0.0
    %980 = vmatpush.msra.mxu0 0.0
    %981 = vmatpush.msra.mxu0 0.0
    %982 = vmatpush.msra.mxu0 %v966
    %983 = vmatpush.msra.mxu0 %v960
    %984 = vmatmul.f32.gmra.mxu0 %v963
    %v985 = vpop.f32.mrf.mxu0
    %v986 = vadd.f32 0.0, %v985
    %987 = vdwg.mxu0
    %v988 = vadd.f32 %v958, %v986
    %s989 = scalar_lea.vmem %s4, 96
    %v990 = vld [vmem:[%s989] sm:$0xff]
    %v991 = vld [vmem:[%s989 + $0x8] sm:$0x7f]
    %v992 = vrot.slane %v803, 6
    %v993 = vsel %vm811, %v992, 0
    %v996 = vsel %vm144, %v991, 0
    %998 = vmatpush.msra.mxu0 0.0
    %999 = vmatpush.msra.mxu0 0.0
    %1000 = vmatpush.msra.mxu0 0.0
    %1001 = vmatpush.msra.mxu0 0.0
    %1002 = vmatpush.msra.mxu0 0.0
    %1003 = vmatpush.msra.mxu0 0.0
    %1004 = vmatpush.msra.mxu0 0.0
    %1005 = vmatpush.msra.mxu0 0.0
    %1006 = vmatpush.msra.mxu0 0.0
    %1007 = vmatpush.msra.mxu0 0.0
    %1008 = vmatpush.msra.mxu0 0.0
    %1009 = vmatpush.msra.mxu0 0.0
    %1010 = vmatpush.msra.mxu0 0.0
    %1011 = vmatpush.msra.mxu0 0.0
    %1012 = vmatpush.msra.mxu0 %v996
    %1013 = vmatpush.msra.mxu0 %v990
    %1014 = vmatmul.f32.gmra.mxu0 %v993
    %v1015 = vpop.f32.mrf.mxu0
    %v1016 = vadd.f32 0.0, %v1015
    %1017 = vdwg.mxu0
    %v1018 = vadd.f32 %v988, %v1016
    %s1019 = scalar_lea.vmem %s4, 112
    %v1020 = vld [vmem:[%s1019] sm:$0xff]
    %v1021 = vld [vmem:[%s1019 + $0x8] sm:$0x7f]
    %v1022 = vrot.slane %v803, 7
    %v1023 = vsel %vm811, %v1022, 0
    %v1026 = vsel %vm144, %v1021, 0
    %1028 = vmatpush.msra.mxu0 0.0
    %1029 = vmatpush.msra.mxu0 0.0
    %1030 = vmatpush.msra.mxu0 0.0
    %1031 = vmatpush.msra.mxu0 0.0
    %1032 = vmatpush.msra.mxu0 0.0
    %1033 = vmatpush.msra.mxu0 0.0
    %1034 = vmatpush.msra.mxu0 0.0
    %1035 = vmatpush.msra.mxu0 0.0
    %1036 = vmatpush.msra.mxu0 0.0
    %1037 = vmatpush.msra.mxu0 0.0
    %1038 = vmatpush.msra.mxu0 0.0
    %1039 = vmatpush.msra.mxu0 0.0
    %1040 = vmatpush.msra.mxu0 0.0
    %1041 = vmatpush.msra.mxu0 0.0
    %1042 = vmatpush.msra.mxu0 %v1026
    %1043 = vmatpush.msra.mxu0 %v1020
    %1044 = vmatmul.f32.gmra.mxu0 %v1023
    %v1045 = vpop.f32.mrf.mxu0
    %v1046 = vadd.f32 0.0, %v1045
    %1047 = vdwg.mxu0
    %v1048 = vadd.f32 %v1018, %v1046
    %s1049 = scalar_lea.vmem %s4, 128
    %v1050 = vld [vmem:[%s1049] sm:$0xff]
    %v1051 = vld [vmem:[%s1049 + $0x8] sm:$0x7f]
    %v1053 = vsel %vm811, %v806, 0
    %v1056 = vsel %vm144, %v1051, 0
    %1058 = vmatpush.msra.mxu0 0.0
    %1059 = vmatpush.msra.mxu0 0.0
    %1060 = vmatpush.msra.mxu0 0.0
    %1061 = vmatpush.msra.mxu0 0.0
    %1062 = vmatpush.msra.mxu0 0.0
    %1063 = vmatpush.msra.mxu0 0.0
    %1064 = vmatpush.msra.mxu0 0.0
    %1065 = vmatpush.msra.mxu0 0.0
    %1066 = vmatpush.msra.mxu0 0.0
    %1067 = vmatpush.msra.mxu0 0.0
    %1068 = vmatpush.msra.mxu0 0.0
    %1069 = vmatpush.msra.mxu0 0.0
    %1070 = vmatpush.msra.mxu0 0.0
    %1071 = vmatpush.msra.mxu0 0.0
    %1072 = vmatpush.msra.mxu0 %v1056
    %1073 = vmatpush.msra.mxu0 %v1050
    %1074 = vmatmul.f32.gmra.mxu0 %v1053
    %v1075 = vpop.f32.mrf.mxu0
    %v1076 = vadd.f32 0.0, %v1075
    %1077 = vdwg.mxu0
    %v1078 = vadd.f32 %v1048, %v1076
    %s1079 = scalar_lea.vmem %s4, 144
    %v1080 = vld [vmem:[%s1079] sm:$0xff]
    %v1081 = vld [vmem:[%s1079 + $0x8] sm:$0x7f]
    %v1082 = vrot.slane %v806, 1
    %v1083 = vsel %vm811, %v1082, 0
    %v1086 = vsel %vm144, %v1081, 0
    %1088 = vmatpush.msra.mxu0 0.0
    %1089 = vmatpush.msra.mxu0 0.0
    %1090 = vmatpush.msra.mxu0 0.0
    %1091 = vmatpush.msra.mxu0 0.0
    %1092 = vmatpush.msra.mxu0 0.0
    %1093 = vmatpush.msra.mxu0 0.0
    %1094 = vmatpush.msra.mxu0 0.0
    %1095 = vmatpush.msra.mxu0 0.0
    %1096 = vmatpush.msra.mxu0 0.0
    %1097 = vmatpush.msra.mxu0 0.0
    %1098 = vmatpush.msra.mxu0 0.0
    %1099 = vmatpush.msra.mxu0 0.0
    %1100 = vmatpush.msra.mxu0 0.0
    %1101 = vmatpush.msra.mxu0 0.0
    %1102 = vmatpush.msra.mxu0 %v1086
    %1103 = vmatpush.msra.mxu0 %v1080
    %1104 = vmatmul.f32.gmra.mxu0 %v1083
    %v1105 = vpop.f32.mrf.mxu0
    %v1106 = vadd.f32 0.0, %v1105
    %1107 = vdwg.mxu0
    %v1108 = vadd.f32 %v1078, %v1106
    %s1109 = scalar_lea.vmem %s4, 160
    %v1110 = vld [vmem:[%s1109] sm:$0xff]
    %v1111 = vld [vmem:[%s1109 + $0x8] sm:$0x7f]
    %v1112 = vrot.slane %v806, 2
    %v1113 = vsel %vm811, %v1112, 0
    %v1116 = vsel %vm144, %v1111, 0
    %1118 = vmatpush.msra.mxu0 0.0
    %1119 = vmatpush.msra.mxu0 0.0
    %1120 = vmatpush.msra.mxu0 0.0
    %1121 = vmatpush.msra.mxu0 0.0
    %1122 = vmatpush.msra.mxu0 0.0
    %1123 = vmatpush.msra.mxu0 0.0
    %1124 = vmatpush.msra.mxu0 0.0
    %1125 = vmatpush.msra.mxu0 0.0
    %1126 = vmatpush.msra.mxu0 0.0
    %1127 = vmatpush.msra.mxu0 0.0
    %1128 = vmatpush.msra.mxu0 0.0
    %1129 = vmatpush.msra.mxu0 0.0
    %1130 = vmatpush.msra.mxu0 0.0
    %1131 = vmatpush.msra.mxu0 0.0
    %1132 = vmatpush.msra.mxu0 %v1116
    %1133 = vmatpush.msra.mxu0 %v1110
    %1134 = vmatmul.f32.gmra.mxu0 %v1113
    %v1135 = vpop.f32.mrf.mxu0
    %v1136 = vadd.f32 0.0, %v1135
    %1137 = vdwg.mxu0
    %v1138 = vadd.f32 %v1108, %v1136
    %s1139 = scalar_lea.vmem %s4, 176
    %v1140 = vld [vmem:[%s1139] sm:$0xff]
    %v1141 = vld [vmem:[%s1139 + $0x8] sm:$0x7f]
    %v1142 = vrot.slane %v806, 3
    %v1143 = vsel %vm811, %v1142, 0
    %v1146 = vsel %vm144, %v1141, 0
    %1148 = vmatpush.msra.mxu0 0.0
    %1149 = vmatpush.msra.mxu0 0.0
    %1150 = vmatpush.msra.mxu0 0.0
    %1151 = vmatpush.msra.mxu0 0.0
    %1152 = vmatpush.msra.mxu0 0.0
    %1153 = vmatpush.msra.mxu0 0.0
    %1154 = vmatpush.msra.mxu0 0.0
    %1155 = vmatpush.msra.mxu0 0.0
    %1156 = vmatpush.msra.mxu0 0.0
    %1157 = vmatpush.msra.mxu0 0.0
    %1158 = vmatpush.msra.mxu0 0.0
    %1159 = vmatpush.msra.mxu0 0.0
    %1160 = vmatpush.msra.mxu0 0.0
    %1161 = vmatpush.msra.mxu0 0.0
    %1162 = vmatpush.msra.mxu0 %v1146
    %1163 = vmatpush.msra.mxu0 %v1140
    %1164 = vmatmul.f32.gmra.mxu0 %v1143
    %v1165 = vpop.f32.mrf.mxu0
    %v1166 = vadd.f32 0.0, %v1165
    %1167 = vdwg.mxu0
    %v1168 = vadd.f32 %v1138, %v1166
    %s1169 = scalar_lea.vmem %s4, 192
    %v1170 = vld [vmem:[%s1169] sm:$0xff]
    %v1171 = vld [vmem:[%s1169 + $0x8] sm:$0x7f]
    %v1172 = vrot.slane %v806, 4
    %v1173 = vsel %vm811, %v1172, 0
    %v1176 = vsel %vm144, %v1171, 0
    %1178 = vmatpush.msra.mxu0 0.0
    %1179 = vmatpush.msra.mxu0 0.0
    %1180 = vmatpush.msra.mxu0 0.0
    %1181 = vmatpush.msra.mxu0 0.0
    %1182 = vmatpush.msra.mxu0 0.0
    %1183 = vmatpush.msra.mxu0 0.0
    %1184 = vmatpush.msra.mxu0 0.0
    %1185 = vmatpush.msra.mxu0 0.0
    %1186 = vmatpush.msra.mxu0 0.0
    %1187 = vmatpush.msra.mxu0 0.0
    %1188 = vmatpush.msra.mxu0 0.0
    %1189 = vmatpush.msra.mxu0 0.0
    %1190 = vmatpush.msra.mxu0 0.0
    %1191 = vmatpush.msra.mxu0 0.0
    %1192 = vmatpush.msra.mxu0 %v1176
    %1193 = vmatpush.msra.mxu0 %v1170
    %1194 = vmatmul.f32.gmra.mxu0 %v1173
    %v1195 = vpop.f32.mrf.mxu0
    %v1196 = vadd.f32 0.0, %v1195
    %1197 = vdwg.mxu0
    %v1198 = vadd.f32 %v1168, %v1196
    %s1199 = scalar_lea.vmem %s4, 208
    %v1200 = vld [vmem:[%s1199] sm:$0xff]
    %v1201 = vld [vmem:[%s1199 + $0x8] sm:$0x7f]
    %v1202 = vrot.slane %v806, 5
    %v1203 = vsel %vm811, %v1202, 0
    %v1206 = vsel %vm144, %v1201, 0
    %1208 = vmatpush.msra.mxu0 0.0
    %1209 = vmatpush.msra.mxu0 0.0
    %1210 = vmatpush.msra.mxu0 0.0
    %1211 = vmatpush.msra.mxu0 0.0
    %1212 = vmatpush.msra.mxu0 0.0
    %1213 = vmatpush.msra.mxu0 0.0
    %1214 = vmatpush.msra.mxu0 0.0
    %1215 = vmatpush.msra.mxu0 0.0
    %1216 = vmatpush.msra.mxu0 0.0
    %1217 = vmatpush.msra.mxu0 0.0
    %1218 = vmatpush.msra.mxu0 0.0
    %1219 = vmatpush.msra.mxu0 0.0
    %1220 = vmatpush.msra.mxu0 0.0
    %1221 = vmatpush.msra.mxu0 0.0
    %1222 = vmatpush.msra.mxu0 %v1206
    %1223 = vmatpush.msra.mxu0 %v1200
    %1224 = vmatmul.f32.gmra.mxu0 %v1203
    %v1225 = vpop.f32.mrf.mxu0
    %v1226 = vadd.f32 0.0, %v1225
    %1227 = vdwg.mxu0
    %v1228 = vadd.f32 %v1198, %v1226
    %s1229 = scalar_lea.vmem %s4, 224
    %v1230 = vld [vmem:[%s1229] sm:$0xff]
    %v1231 = vld [vmem:[%s1229 + $0x8] sm:$0x7f]
    %v1232 = vrot.slane %v806, 6
    %v1233 = vsel %vm811, %v1232, 0
    %v1236 = vsel %vm144, %v1231, 0
    %1238 = vmatpush.msra.mxu0 0.0
    %1239 = vmatpush.msra.mxu0 0.0
    %1240 = vmatpush.msra.mxu0 0.0
    %1241 = vmatpush.msra.mxu0 0.0
    %1242 = vmatpush.msra.mxu0 0.0
    %1243 = vmatpush.msra.mxu0 0.0
    %1244 = vmatpush.msra.mxu0 0.0
    %1245 = vmatpush.msra.mxu0 0.0
    %1246 = vmatpush.msra.mxu0 0.0
    %1247 = vmatpush.msra.mxu0 0.0
    %1248 = vmatpush.msra.mxu0 0.0
    %1249 = vmatpush.msra.mxu0 0.0
    %1250 = vmatpush.msra.mxu0 0.0
    %1251 = vmatpush.msra.mxu0 0.0
    %1252 = vmatpush.msra.mxu0 %v1236
    %1253 = vmatpush.msra.mxu0 %v1230
    %1254 = vmatmul.f32.gmra.mxu0 %v1233
    %v1255 = vpop.f32.mrf.mxu0
    %v1256 = vadd.f32 0.0, %v1255
    %1257 = vdwg.mxu0
    %v1258 = vadd.f32 %v1228, %v1256
    %v1259 = vld [vmem:[%s6] sm:$0xff]
    %v1260 = vld [vmem:[%s6 + $0x8] sm:$0xff]
    %v1261 = vld [vmem:[%s6 + $0x10] sm:$0xff]
    %v1262 = vld [vmem:[%s6 + $0x18] sm:$0xff]
    %v1263 = vld [vmem:[%s6 + $0x20] sm:$0xff]
    %v1264 = vld [vmem:[%s6 + $0x28] sm:$0xff]
    %v1265 = vld [vmem:[%s6 + $0x30] sm:$0x3]
    %vm1266 = vcmask 408576
    %v1268 = vsel %vm1266, %v1258, 0
    %vm1270 = vcmask 1041408
    %v1272 = vsel %vm1270, %v1265, 0
    %1274 = vmatpush.msra.mxu0 0.0
    %1275 = vmatpush.msra.mxu0 0.0
    %1276 = vmatpush.msra.mxu0 0.0
    %1277 = vmatpush.msra.mxu0 0.0
    %1278 = vmatpush.msra.mxu0 0.0
    %1279 = vmatpush.msra.mxu0 0.0
    %1280 = vmatpush.msra.mxu0 0.0
    %1281 = vmatpush.msra.mxu0 0.0
    %1282 = vmatpush.msra.mxu0 0.0
    %1283 = vmatpush.msra.mxu0 %v1272
    %1284 = vmatpush.msra.mxu0 %v1264
    %1285 = vmatpush.msra.mxu0 %v1263
    %1286 = vmatpush.msra.mxu0 %v1262
    %1287 = vmatpush.msra.mxu0 %v1261
    %1288 = vmatpush.msra.mxu0 %v1260
    %1289 = vmatpush.msra.mxu0 %v1259
    %1290 = vmatmul.f32.gmra.mxu0 %v1268
    %v1291 = vpop.f32.mrf.mxu0
    %v1292 = vadd.f32 0.0, %v1291
    %1293 = vdwg.mxu0
    %s1294 = scalar_lea.vmem %s6, 56
    %v1295 = vld [vmem:[%s1294] sm:$0xff]
    %v1296 = vld [vmem:[%s1294 + $0x8] sm:$0xff]
    %v1297 = vld [vmem:[%s1294 + $0x10] sm:$0xff]
    %v1298 = vld [vmem:[%s1294 + $0x18] sm:$0xff]
    %v1299 = vld [vmem:[%s1294 + $0x20] sm:$0xff]
    %v1300 = vld [vmem:[%s1294 + $0x28] sm:$0xff]
    %v1301 = vld [vmem:[%s1294 + $0x30] sm:$0x3]
    %v1303 = vsel %vm1270, %v1301, 0
    %1305 = vmatpush.msra.mxu0 0.0
    %1306 = vmatpush.msra.mxu0 0.0
    %1307 = vmatpush.msra.mxu0 0.0
    %1308 = vmatpush.msra.mxu0 0.0
    %1309 = vmatpush.msra.mxu0 0.0
    %1310 = vmatpush.msra.mxu0 0.0
    %1311 = vmatpush.msra.mxu0 0.0
    %1312 = vmatpush.msra.mxu0 0.0
    %1313 = vmatpush.msra.mxu0 0.0
    %1314 = vmatpush.msra.mxu0 %v1303
    %1315 = vmatpush.msra.mxu0 %v1300
    %1316 = vmatpush.msra.mxu0 %v1299
    %1317 = vmatpush.msra.mxu0 %v1298
    %1318 = vmatpush.msra.mxu0 %v1297
    %1319 = vmatpush.msra.mxu0 %v1296
    %1320 = vmatpush.msra.mxu0 %v1295
    %1321 = vmatmul.f32.gmra.mxu0 %v1268
    %v1322 = vpop.f32.mrf.mxu0
    %v1323 = vadd.f32 0.0, %v1322
    %1324 = vdwg.mxu0
    %s1325 = scalar_lea.vmem %s6, 112
    %v1326 = vld [vmem:[%s1325] sm:$0xff]
    %v1327 = vld [vmem:[%s1325 + $0x8] sm:$0xff]
    %v1328 = vld [vmem:[%s1325 + $0x10] sm:$0xff]
    %v1329 = vld [vmem:[%s1325 + $0x18] sm:$0xff]
    %v1330 = vld [vmem:[%s1325 + $0x20] sm:$0xff]
    %v1331 = vld [vmem:[%s1325 + $0x28] sm:$0xff]
    %v1332 = vld [vmem:[%s1325 + $0x30] sm:$0x3]
    %v1334 = vsel %vm1270, %v1332, 0
    %1336 = vmatpush.msra.mxu0 0.0
    %1337 = vmatpush.msra.mxu0 0.0
    %1338 = vmatpush.msra.mxu0 0.0
    %1339 = vmatpush.msra.mxu0 0.0
    %1340 = vmatpush.msra.mxu0 0.0
    %1341 = vmatpush.msra.mxu0 0.0
    %1342 = vmatpush.msra.mxu0 0.0
    %1343 = vmatpush.msra.mxu0 0.0
    %1344 = vmatpush.msra.mxu0 0.0
    %1345 = vmatpush.msra.mxu0 %v1334
    %1346 = vmatpush.msra.mxu0 %v1331
    %1347 = vmatpush.msra.mxu0 %v1330
    %1348 = vmatpush.msra.mxu0 %v1329
    %1349 = vmatpush.msra.mxu0 %v1328
    %1350 = vmatpush.msra.mxu0 %v1327
    %1351 = vmatpush.msra.mxu0 %v1326
    %1352 = vmatmul.f32.gmra.mxu0 %v1268
    %v1353 = vpop.f32.mrf.mxu0
    %v1354 = vadd.f32 0.0, %v1353
    %1355 = vdwg.mxu0
    %s1356 = scalar_lea.vmem %s6, 168
    %v1357 = vld [vmem:[%s1356] sm:$0xff]
    %v1358 = vld [vmem:[%s1356 + $0x8] sm:$0xff]
    %v1359 = vld [vmem:[%s1356 + $0x10] sm:$0xff]
    %v1360 = vld [vmem:[%s1356 + $0x18] sm:$0xff]
    %v1361 = vld [vmem:[%s1356 + $0x20] sm:$0xff]
    %v1362 = vld [vmem:[%s1356 + $0x28] sm:$0xff]
    %v1363 = vld [vmem:[%s1356 + $0x30] sm:$0x3]
    %v1365 = vsel %vm1270, %v1363, 0
    %1367 = vmatpush.msra.mxu0 0.0
    %1368 = vmatpush.msra.mxu0 0.0
    %1369 = vmatpush.msra.mxu0 0.0
    %1370 = vmatpush.msra.mxu0 0.0
    %1371 = vmatpush.msra.mxu0 0.0
    %1372 = vmatpush.msra.mxu0 0.0
    %1373 = vmatpush.msra.mxu0 0.0
    %1374 = vmatpush.msra.mxu0 0.0
    %1375 = vmatpush.msra.mxu0 0.0
    %1376 = vmatpush.msra.mxu0 %v1365
    %1377 = vmatpush.msra.mxu0 %v1362
    %1378 = vmatpush.msra.mxu0 %v1361
    %1379 = vmatpush.msra.mxu0 %v1360
    %1380 = vmatpush.msra.mxu0 %v1359
    %1381 = vmatpush.msra.mxu0 %v1358
    %1382 = vmatpush.msra.mxu0 %v1357
    %1383 = vmatmul.f32.gmra.mxu0 %v1268
    %v1384 = vpop.f32.mrf.mxu0
    %v1385 = vadd.f32 0.0, %v1384
    %1386 = vdwg.mxu0
    %s1387 = scalar_lea.vmem %s6, 224
    %v1388 = vld [vmem:[%s1387] sm:$0xff]
    %v1389 = vld [vmem:[%s1387 + $0x8] sm:$0xff]
    %v1390 = vld [vmem:[%s1387 + $0x10] sm:$0xff]
    %v1391 = vld [vmem:[%s1387 + $0x18] sm:$0xff]
    %v1392 = vld [vmem:[%s1387 + $0x20] sm:$0xff]
    %v1393 = vld [vmem:[%s1387 + $0x28] sm:$0xff]
    %v1394 = vld [vmem:[%s1387 + $0x30] sm:$0x3]
    %v1396 = vsel %vm1270, %v1394, 0
    %1398 = vmatpush.msra.mxu0 0.0
    %1399 = vmatpush.msra.mxu0 0.0
    %1400 = vmatpush.msra.mxu0 0.0
    %1401 = vmatpush.msra.mxu0 0.0
    %1402 = vmatpush.msra.mxu0 0.0
    %1403 = vmatpush.msra.mxu0 0.0
    %1404 = vmatpush.msra.mxu0 0.0
    %1405 = vmatpush.msra.mxu0 0.0
    %1406 = vmatpush.msra.mxu0 0.0
    %1407 = vmatpush.msra.mxu0 %v1396
    %1408 = vmatpush.msra.mxu0 %v1393
    %1409 = vmatpush.msra.mxu0 %v1392
    %1410 = vmatpush.msra.mxu0 %v1391
    %1411 = vmatpush.msra.mxu0 %v1390
    %1412 = vmatpush.msra.mxu0 %v1389
    %1413 = vmatpush.msra.mxu0 %v1388
    %1414 = vmatmul.f32.gmra.mxu0 %v1268
    %v1415 = vpop.f32.mrf.mxu0
    %v1416 = vadd.f32 0.0, %v1415
    %1417 = vdwg.mxu0
    %s1418 = scalar_lea.vmem %s6, 280
    %v1419 = vld [vmem:[%s1418] sm:$0xff]
    %v1420 = vld [vmem:[%s1418 + $0x8] sm:$0xff]
    %v1421 = vld [vmem:[%s1418 + $0x10] sm:$0xff]
    %v1422 = vld [vmem:[%s1418 + $0x18] sm:$0xff]
    %v1423 = vld [vmem:[%s1418 + $0x20] sm:$0xff]
    %v1424 = vld [vmem:[%s1418 + $0x28] sm:$0xff]
    %v1425 = vld [vmem:[%s1418 + $0x30] sm:$0x3]
    %v1427 = vsel %vm1270, %v1425, 0
    %1429 = vmatpush.msra.mxu0 0.0
    %1430 = vmatpush.msra.mxu0 0.0
    %1431 = vmatpush.msra.mxu0 0.0
    %1432 = vmatpush.msra.mxu0 0.0
    %1433 = vmatpush.msra.mxu0 0.0
    %1434 = vmatpush.msra.mxu0 0.0
    %1435 = vmatpush.msra.mxu0 0.0
    %1436 = vmatpush.msra.mxu0 0.0
    %1437 = vmatpush.msra.mxu0 0.0
    %1438 = vmatpush.msra.mxu0 %v1427
    %1439 = vmatpush.msra.mxu0 %v1424
    %1440 = vmatpush.msra.mxu0 %v1423
    %1441 = vmatpush.msra.mxu0 %v1422
    %1442 = vmatpush.msra.mxu0 %v1421
    %1443 = vmatpush.msra.mxu0 %v1420
    %1444 = vmatpush.msra.mxu0 %v1419
    %1445 = vmatmul.f32.gmra.mxu0 %v1268
    %v1446 = vpop.f32.mrf.mxu0
    %v1447 = vadd.f32 0.0, %v1446
    %1448 = vdwg.mxu0
    %s1449 = scalar_lea.vmem %s6, 336
    %v1450 = vld [vmem:[%s1449] sm:$0xff]
    %v1451 = vld [vmem:[%s1449 + $0x8] sm:$0xff]
    %v1452 = vld [vmem:[%s1449 + $0x10] sm:$0xff]
    %v1453 = vld [vmem:[%s1449 + $0x18] sm:$0xff]
    %v1454 = vld [vmem:[%s1449 + $0x20] sm:$0xff]
    %v1455 = vld [vmem:[%s1449 + $0x28] sm:$0xff]
    %v1456 = vld [vmem:[%s1449 + $0x30] sm:$0x3]
    %v1458 = vsel %vm1270, %v1456, 0
    %1460 = vmatpush.msra.mxu0 0.0
    %1461 = vmatpush.msra.mxu0 0.0
    %1462 = vmatpush.msra.mxu0 0.0
    %1463 = vmatpush.msra.mxu0 0.0
    %1464 = vmatpush.msra.mxu0 0.0
    %1465 = vmatpush.msra.mxu0 0.0
    %1466 = vmatpush.msra.mxu0 0.0
    %1467 = vmatpush.msra.mxu0 0.0
    %1468 = vmatpush.msra.mxu0 0.0
    %1469 = vmatpush.msra.mxu0 %v1458
    %1470 = vmatpush.msra.mxu0 %v1455
    %1471 = vmatpush.msra.mxu0 %v1454
    %1472 = vmatpush.msra.mxu0 %v1453
    %1473 = vmatpush.msra.mxu0 %v1452
    %1474 = vmatpush.msra.mxu0 %v1451
    %1475 = vmatpush.msra.mxu0 %v1450
    %1476 = vmatmul.f32.gmra.mxu0 %v1268
    %v1477 = vpop.f32.mrf.mxu0
    %v1478 = vadd.f32 0.0, %v1477
    %1479 = vdwg.mxu0
    %s1480 = scalar_lea.vmem %s6, 392
    %v1481 = vld [vmem:[%s1480] sm:$0xff]
    %v1482 = vld [vmem:[%s1480 + $0x8] sm:$0xff]
    %v1483 = vld [vmem:[%s1480 + $0x10] sm:$0xff]
    %v1484 = vld [vmem:[%s1480 + $0x18] sm:$0xff]
    %v1485 = vld [vmem:[%s1480 + $0x20] sm:$0xff]
    %v1486 = vld [vmem:[%s1480 + $0x28] sm:$0xff]
    %v1487 = vld [vmem:[%s1480 + $0x30] sm:$0x3]
    %v1489 = vsel %vm1270, %v1487, 0
    %1491 = vmatpush.msra.mxu0 0.0
    %1492 = vmatpush.msra.mxu0 0.0
    %1493 = vmatpush.msra.mxu0 0.0
    %1494 = vmatpush.msra.mxu0 0.0
    %1495 = vmatpush.msra.mxu0 0.0
    %1496 = vmatpush.msra.mxu0 0.0
    %1497 = vmatpush.msra.mxu0 0.0
    %1498 = vmatpush.msra.mxu0 0.0
    %1499 = vmatpush.msra.mxu0 0.0
    %1500 = vmatpush.msra.mxu0 %v1489
    %1501 = vmatpush.msra.mxu0 %v1486
    %1502 = vmatpush.msra.mxu0 %v1485
    %1503 = vmatpush.msra.mxu0 %v1484
    %1504 = vmatpush.msra.mxu0 %v1483
    %1505 = vmatpush.msra.mxu0 %v1482
    %1506 = vmatpush.msra.mxu0 %v1481
    %1507 = vmatmul.f32.gmra.mxu0 %v1268
    %v1508 = vpop.f32.mrf.mxu0
    %v1509 = vadd.f32 0.0, %v1508
    %1510 = vdwg.mxu0
    %s1511 = scalar_lea.vmem %s6, 448
    %v1512 = vld [vmem:[%s1511] sm:$0xff]
    %v1513 = vld [vmem:[%s1511 + $0x8] sm:$0xff]
    %v1514 = vld [vmem:[%s1511 + $0x10] sm:$0xff]
    %v1515 = vld [vmem:[%s1511 + $0x18] sm:$0xff]
    %v1516 = vld [vmem:[%s1511 + $0x20] sm:$0xff]
    %v1517 = vld [vmem:[%s1511 + $0x28] sm:$0xff]
    %v1518 = vld [vmem:[%s1511 + $0x30] sm:$0x3]
    %v1520 = vsel %vm1270, %v1518, 0
    %1522 = vmatpush.msra.mxu0 0.0
    %1523 = vmatpush.msra.mxu0 0.0
    %1524 = vmatpush.msra.mxu0 0.0
    %1525 = vmatpush.msra.mxu0 0.0
    %1526 = vmatpush.msra.mxu0 0.0
    %1527 = vmatpush.msra.mxu0 0.0
    %1528 = vmatpush.msra.mxu0 0.0
    %1529 = vmatpush.msra.mxu0 0.0
    %1530 = vmatpush.msra.mxu0 0.0
    %1531 = vmatpush.msra.mxu0 %v1520
    %1532 = vmatpush.msra.mxu0 %v1517
    %1533 = vmatpush.msra.mxu0 %v1516
    %1534 = vmatpush.msra.mxu0 %v1515
    %1535 = vmatpush.msra.mxu0 %v1514
    %1536 = vmatpush.msra.mxu0 %v1513
    %1537 = vmatpush.msra.mxu0 %v1512
    %1538 = vmatmul.f32.gmra.mxu0 %v1268
    %v1539 = vpop.f32.mrf.mxu0
    %v1540 = vadd.f32 0.0, %v1539
    %1541 = vdwg.mxu0
    %s1542 = scalar_lea.vmem %s6, 504
    %v1543 = vld [vmem:[%s1542] sm:$0xff]
    %v1544 = vld [vmem:[%s1542 + $0x8] sm:$0xff]
    %v1545 = vld [vmem:[%s1542 + $0x10] sm:$0xff]
    %v1546 = vld [vmem:[%s1542 + $0x18] sm:$0xff]
    %v1547 = vld [vmem:[%s1542 + $0x20] sm:$0xff]
    %v1548 = vld [vmem:[%s1542 + $0x28] sm:$0xff]
    %v1549 = vld [vmem:[%s1542 + $0x30] sm:$0x3]
    %v1551 = vsel %vm1270, %v1549, 0
    %1553 = vmatpush.msra.mxu0 0.0
    %1554 = vmatpush.msra.mxu0 0.0
    %1555 = vmatpush.msra.mxu0 0.0
    %1556 = vmatpush.msra.mxu0 0.0
    %1557 = vmatpush.msra.mxu0 0.0
    %1558 = vmatpush.msra.mxu0 0.0
    %1559 = vmatpush.msra.mxu0 0.0
    %1560 = vmatpush.msra.mxu0 0.0
    %1561 = vmatpush.msra.mxu0 0.0
    %1562 = vmatpush.msra.mxu0 %v1551
    %1563 = vmatpush.msra.mxu0 %v1548
    %1564 = vmatpush.msra.mxu0 %v1547
    %1565 = vmatpush.msra.mxu0 %v1546
    %1566 = vmatpush.msra.mxu0 %v1545
    %1567 = vmatpush.msra.mxu0 %v1544
    %1568 = vmatpush.msra.mxu0 %v1543
    %1569 = vmatmul.f32.gmra.mxu0 %v1268
    %v1570 = vpop.f32.mrf.mxu0
    %v1571 = vadd.f32 0.0, %v1570
    %1572 = vdwg.mxu0
    %s1573 = scalar_lea.vmem %s6, 560
    %v1574 = vld [vmem:[%s1573] sm:$0xff]
    %v1575 = vld [vmem:[%s1573 + $0x8] sm:$0xff]
    %v1576 = vld [vmem:[%s1573 + $0x10] sm:$0xff]
    %v1577 = vld [vmem:[%s1573 + $0x18] sm:$0xff]
    %v1578 = vld [vmem:[%s1573 + $0x20] sm:$0xff]
    %v1579 = vld [vmem:[%s1573 + $0x28] sm:$0xff]
    %v1580 = vld [vmem:[%s1573 + $0x30] sm:$0x3]
    %v1582 = vsel %vm1270, %v1580, 0
    %1584 = vmatpush.msra.mxu0 0.0
    %1585 = vmatpush.msra.mxu0 0.0
    %1586 = vmatpush.msra.mxu0 0.0
    %1587 = vmatpush.msra.mxu0 0.0
    %1588 = vmatpush.msra.mxu0 0.0
    %1589 = vmatpush.msra.mxu0 0.0
    %1590 = vmatpush.msra.mxu0 0.0
    %1591 = vmatpush.msra.mxu0 0.0
    %1592 = vmatpush.msra.mxu0 0.0
    %1593 = vmatpush.msra.mxu0 %v1582
    %1594 = vmatpush.msra.mxu0 %v1579
    %1595 = vmatpush.msra.mxu0 %v1578
    %1596 = vmatpush.msra.mxu0 %v1577
    %1597 = vmatpush.msra.mxu0 %v1576
    %1598 = vmatpush.msra.mxu0 %v1575
    %1599 = vmatpush.msra.mxu0 %v1574
    %1600 = vmatmul.f32.gmra.mxu0 %v1268
    %v1601 = vpop.f32.mrf.mxu0
    %v1602 = vadd.f32 0.0, %v1601
    %1603 = vdwg.mxu0
    %s1604 = scalar_lea.vmem %s6, 616
    %v1605 = vld [vmem:[%s1604] sm:$0xff]
    %v1606 = vld [vmem:[%s1604 + $0x8] sm:$0xff]
    %v1607 = vld [vmem:[%s1604 + $0x10] sm:$0xff]
    %v1608 = vld [vmem:[%s1604 + $0x18] sm:$0xff]
    %v1609 = vld [vmem:[%s1604 + $0x20] sm:$0xff]
    %v1610 = vld [vmem:[%s1604 + $0x28] sm:$0xff]
    %v1611 = vld [vmem:[%s1604 + $0x30] sm:$0x3]
    %v1613 = vsel %vm1270, %v1611, 0
    %1615 = vmatpush.msra.mxu0 0.0
    %1616 = vmatpush.msra.mxu0 0.0
    %1617 = vmatpush.msra.mxu0 0.0
    %1618 = vmatpush.msra.mxu0 0.0
    %1619 = vmatpush.msra.mxu0 0.0
    %1620 = vmatpush.msra.mxu0 0.0
    %1621 = vmatpush.msra.mxu0 0.0
    %1622 = vmatpush.msra.mxu0 0.0
    %1623 = vmatpush.msra.mxu0 0.0
    %1624 = vmatpush.msra.mxu0 %v1613
    %1625 = vmatpush.msra.mxu0 %v1610
    %1626 = vmatpush.msra.mxu0 %v1609
    %1627 = vmatpush.msra.mxu0 %v1608
    %1628 = vmatpush.msra.mxu0 %v1607
    %1629 = vmatpush.msra.mxu0 %v1606
    %1630 = vmatpush.msra.mxu0 %v1605
    %1631 = vmatmul.f32.gmra.mxu0 %v1268
    %v1632 = vpop.f32.mrf.mxu0
    %v1633 = vadd.f32 0.0, %v1632
    %1634 = vdwg.mxu0
    %s1635 = scalar_lea.vmem %s6, 672
    %v1636 = vld [vmem:[%s1635] sm:$0xff]
    %v1637 = vld [vmem:[%s1635 + $0x8] sm:$0xff]
    %v1638 = vld [vmem:[%s1635 + $0x10] sm:$0xff]
    %v1639 = vld [vmem:[%s1635 + $0x18] sm:$0xff]
    %v1640 = vld [vmem:[%s1635 + $0x20] sm:$0xff]
    %v1641 = vld [vmem:[%s1635 + $0x28] sm:$0xff]
    %v1642 = vld [vmem:[%s1635 + $0x30] sm:$0x3]
    %v1644 = vsel %vm1270, %v1642, 0
    %1646 = vmatpush.msra.mxu0 0.0
    %1647 = vmatpush.msra.mxu0 0.0
    %1648 = vmatpush.msra.mxu0 0.0
    %1649 = vmatpush.msra.mxu0 0.0
    %1650 = vmatpush.msra.mxu0 0.0
    %1651 = vmatpush.msra.mxu0 0.0
    %1652 = vmatpush.msra.mxu0 0.0
    %1653 = vmatpush.msra.mxu0 0.0
    %1654 = vmatpush.msra.mxu0 0.0
    %1655 = vmatpush.msra.mxu0 %v1644
    %1656 = vmatpush.msra.mxu0 %v1641
    %1657 = vmatpush.msra.mxu0 %v1640
    %1658 = vmatpush.msra.mxu0 %v1639
    %1659 = vmatpush.msra.mxu0 %v1638
    %1660 = vmatpush.msra.mxu0 %v1637
    %1661 = vmatpush.msra.mxu0 %v1636
    %1662 = vmatmul.f32.gmra.mxu0 %v1268
    %v1663 = vpop.f32.mrf.mxu0
    %v1664 = vadd.f32 0.0, %v1663
    %1665 = vdwg.mxu0
    %s1666 = scalar_lea.vmem %s6, 728
    %v1667 = vld [vmem:[%s1666] sm:$0xff]
    %v1668 = vld [vmem:[%s1666 + $0x8] sm:$0xff]
    %v1669 = vld [vmem:[%s1666 + $0x10] sm:$0xff]
    %v1670 = vld [vmem:[%s1666 + $0x18] sm:$0xff]
    %v1671 = vld [vmem:[%s1666 + $0x20] sm:$0xff]
    %v1672 = vld [vmem:[%s1666 + $0x28] sm:$0xff]
    %v1673 = vld [vmem:[%s1666 + $0x30] sm:$0x3]
    %v1675 = vsel %vm1270, %v1673, 0
    %1677 = vmatpush.msra.mxu0 0.0
    %1678 = vmatpush.msra.mxu0 0.0
    %1679 = vmatpush.msra.mxu0 0.0
    %1680 = vmatpush.msra.mxu0 0.0
    %1681 = vmatpush.msra.mxu0 0.0
    %1682 = vmatpush.msra.mxu0 0.0
    %1683 = vmatpush.msra.mxu0 0.0
    %1684 = vmatpush.msra.mxu0 0.0
    %1685 = vmatpush.msra.mxu0 0.0
    %1686 = vmatpush.msra.mxu0 %v1675
    %1687 = vmatpush.msra.mxu0 %v1672
    %1688 = vmatpush.msra.mxu0 %v1671
    %1689 = vmatpush.msra.mxu0 %v1670
    %1690 = vmatpush.msra.mxu0 %v1669
    %1691 = vmatpush.msra.mxu0 %v1668
    %1692 = vmatpush.msra.mxu0 %v1667
    %1693 = vmatmul.f32.gmra.mxu0 %v1268
    %v1694 = vpop.f32.mrf.mxu0
    %v1695 = vadd.f32 0.0, %v1694
    %1696 = vdwg.mxu0
    %s1697 = scalar_lea.vmem %s6, 784
    %v1698 = vld [vmem:[%s1697] sm:$0xff]
    %v1699 = vld [vmem:[%s1697 + $0x8] sm:$0xff]
    %v1700 = vld [vmem:[%s1697 + $0x10] sm:$0xff]
    %v1701 = vld [vmem:[%s1697 + $0x18] sm:$0xff]
    %v1702 = vld [vmem:[%s1697 + $0x20] sm:$0xff]
    %v1703 = vld [vmem:[%s1697 + $0x28] sm:$0xff]
    %v1704 = vld [vmem:[%s1697 + $0x30] sm:$0x3]
    %v1706 = vsel %vm1270, %v1704, 0
    %1708 = vmatpush.msra.mxu0 0.0
    %1709 = vmatpush.msra.mxu0 0.0
    %1710 = vmatpush.msra.mxu0 0.0
    %1711 = vmatpush.msra.mxu0 0.0
    %1712 = vmatpush.msra.mxu0 0.0
    %1713 = vmatpush.msra.mxu0 0.0
    %1714 = vmatpush.msra.mxu0 0.0
    %1715 = vmatpush.msra.mxu0 0.0
    %1716 = vmatpush.msra.mxu0 0.0
    %1717 = vmatpush.msra.mxu0 %v1706
    %1718 = vmatpush.msra.mxu0 %v1703
    %1719 = vmatpush.msra.mxu0 %v1702
    %1720 = vmatpush.msra.mxu0 %v1701
    %1721 = vmatpush.msra.mxu0 %v1700
    %1722 = vmatpush.msra.mxu0 %v1699
    %1723 = vmatpush.msra.mxu0 %v1698
    %1724 = vmatmul.f32.gmra.mxu0 %v1268
    %v1725 = vpop.f32.mrf.mxu0
    %v1726 = vadd.f32 0.0, %v1725
    %1727 = vdwg.mxu0
    %v1729 = vrot.slane %v1323, 7
    %v1732 = vrot.slane %v1354, 6
    %v1735 = vrot.slane %v1385, 5
    %v1738 = vrot.slane %v1416, 4
    %v1741 = vrot.slane %v1447, 3
    %v1744 = vrot.slane %v1478, 2
    %v1747 = vrot.slane %v1509, 1
    %v1750 = vrot.slane %v1571, 7
    %v1753 = vrot.slane %v1602, 6
    %v1756 = vrot.slane %v1633, 5
    %v1759 = vrot.slane %v1664, 4
    %v1762 = vrot.slane %v1695, 3
    %v1765 = vrot.slane %v1726, 2
    %v1767 = vsel %vm447, %v1292, %v1729
    %v1768 = vsel %vm1270, %v1767, %v1732
    %vm1769 = vcmask 1042432
    %v1770 = vsel %vm1769, %v1768, %v1735
    %v1771 = vsel %vm261, %v1770, %v1738
    %v1772 = vsel %vm158, %v1771, %v1741
    %v1773 = vsel %vm247, %v1772, %v1744
    %v1774 = vsel %vm144, %v1773, %v1747
    %v1775 = vsel %vm447, %v1540, %v1750
    %v1776 = vsel %vm1270, %v1775, %v1753
    %v1777 = vsel %vm1769, %v1776, %v1756
    %v1778 = vsel %vm261, %v1777, %v1759
    %v1779 = vsel %vm158, %v1778, %v1762
    %v1780 = vsel %vm247, %v1779, %v1765
    %v1781 = vld [vmem:[%s7] sm:$0xff]
    %v1782 = vld [vmem:[%s7 + $0x8] sm:$0x7f]
    %v1783 = vadd.f32 %v1774, %v1781
    %v1784 = vadd.f32 %v1780, %v1782
    %v1785 = vld [vmem:[%s8] sm:$0xff]
    %v1786 = vld [vmem:[%s8 + $0x8] sm:$0xff]
    %v1787 = vld [vmem:[%s8 + $0x10] sm:$0xff]
    %v1788 = vld [vmem:[%s8 + $0x18] sm:$0x3f]
    %v1790 = vsel %vm811, %v1785, 0
    %v1793 = vsel %vm811, %v1786, 0
    %v1796 = vsel %vm811, %v1787, 0
    %v1799 = vsel %vm811, %v1788, 0
    %v1802 = vsel %vm144, %v1784, 0
    %1804 = vmatpush.msra.mxu0 0.0
    %1805 = vmatpush.msra.mxu0 0.0
    %1806 = vmatpush.msra.mxu0 0.0
    %1807 = vmatpush.msra.mxu0 0.0
    %1808 = vmatpush.msra.mxu0 0.0
    %1809 = vmatpush.msra.mxu0 0.0
    %1810 = vmatpush.msra.mxu0 0.0
    %1811 = vmatpush.msra.mxu0 0.0
    %1812 = vmatpush.msra.mxu0 0.0
    %1813 = vmatpush.msra.mxu0 0.0
    %1814 = vmatpush.msra.mxu0 0.0
    %1815 = vmatpush.msra.mxu0 0.0
    %1816 = vmatpush.msra.mxu0 0.0
    %1817 = vmatpush.msra.mxu0 0.0
    %1818 = vmatpush.msra.mxu0 %v1802
    %1819 = vmatpush.msra.mxu0 %v1783
    %1820 = vmatmul.f32.gmra.mxu0 %v1790
    %v1821 = vpop.f32.mrf.mxu0
    %v1822 = vadd.f32 0.0, %v1821
    %1823 = vmatmul.f32.gmra.mxu0 %v1793
    %v1824 = vpop.f32.mrf.mxu0
    %v1825 = vadd.f32 0.0, %v1824
    %1826 = vmatmul.f32.gmra.mxu0 %v1796
    %v1827 = vpop.f32.mrf.mxu0
    %v1828 = vadd.f32 0.0, %v1827
    %1829 = vmatmul.f32.gmra.mxu0 %v1799
    %v1830 = vpop.f32.mrf.mxu0
    %v1831 = vadd.f32 0.0, %v1830
    %1832 = vdwg.mxu0
    %v1833 = vld [vmem:[%s9] sm:$0xff]
    %v1834 = vld [vmem:[%s9 + $0x8] sm:$0x7f]
    %v1836 = vsel %vm811, %v1822, 0
    %v1839 = vsel %vm811, %v1825, 0
    %v1842 = vsel %vm811, %v1828, 0
    %v1845 = vsel %vm811, %v1831, 0
    %v1848 = vsel %vm144, %v1834, 0
    %1850 = vmatpush.msra.mxu0 0.0
    %1851 = vmatpush.msra.mxu0 0.0
    %1852 = vmatpush.msra.mxu0 0.0
    %1853 = vmatpush.msra.mxu0 0.0
    %1854 = vmatpush.msra.mxu0 0.0
    %1855 = vmatpush.msra.mxu0 0.0
    %1856 = vmatpush.msra.mxu0 0.0
    %1857 = vmatpush.msra.mxu0 0.0
    %1858 = vmatpush.msra.mxu0 0.0
    %1859 = vmatpush.msra.mxu0 0.0
    %1860 = vmatpush.msra.mxu0 0.0
    %1861 = vmatpush.msra.mxu0 0.0
    %1862 = vmatpush.msra.mxu0 0.0
    %1863 = vmatpush.msra.mxu0 0.0
    %1864 = vmatpush.msra.mxu0 %v1848
    %1865 = vmatpush.msra.mxu0 %v1833
    %1866 = vmatmul.f32.gmra.mxu0 %v1836
    %v1867 = vpop.f32.mrf.mxu0
    %v1868 = vadd.f32 0.0, %v1867
    %1869 = vmatmul.f32.gmra.mxu0 %v1839
    %v1870 = vpop.f32.mrf.mxu0
    %v1871 = vadd.f32 0.0, %v1870
    %1872 = vmatmul.f32.gmra.mxu0 %v1842
    %v1873 = vpop.f32.mrf.mxu0
    %v1874 = vadd.f32 0.0, %v1873
    %1875 = vmatmul.f32.gmra.mxu0 %v1845
    %v1876 = vpop.f32.mrf.mxu0
    %v1877 = vadd.f32 0.0, %v1876
    %1878 = vdwg.mxu0
    %v1879 = vsel %vm733, %v1868, 0.0
    %v1880 = vsel %vm734, %v1871, 0.0
    %v1881 = vsel %vm735, %v1874, 0.0
    %v1882 = vsel %vm736, %v1877, 0.0
    %s1883 = sld [smem:[#allocation2 + $0xa]]
    %v1884 = vstv %s1883
    %v1885 = vmul.f32 %v1879, %v1884
    %v1886 = vmul.f32 %v1880, %v1884
    %v1887 = vmul.f32 %v1881, %v1884
    %v1888 = vmul.f32 %v1882, %v1884
    %v1889 = vadd.f32 %v1885, 0.0
    %v1890 = vadd.f32 %v1886, 0.0
    %v1891 = vadd.f32 %v1887, 0.0
    %v1892 = vadd.f32 %v1888, 0.0
    %1897 = vrot.lane.b32.xlu0 %v1879, 99
    %v1898 = vpop.permute.xlu0 %1897
    %1899 = vrot.lane.b32.xlu0 %v1880, 99
    %v1900 = vpop.permute.xlu0 %1899
    %1901 = vrot.lane.b32.xlu0 %v1881, 99
    %v1902 = vpop.permute.xlu0 %1901
    %1903 = vrot.lane.b32.xlu0 %v1882, 99
    %v1904 = vpop.permute.xlu0 %1903
    %1909 = vrot.lane.b32.xlu0 %v1879, 1
    %v1910 = vpop.permute.xlu0 %1909
    %1911 = vrot.lane.b32.xlu0 %v1880, 1
    %v1912 = vpop.permute.xlu0 %1911
    %1913 = vrot.lane.b32.xlu0 %v1881, 1
    %v1914 = vpop.permute.xlu0 %1913
    %1915 = vrot.lane.b32.xlu0 %v1882, 1
    %v1916 = vpop.permute.xlu0 %1915
    %v1921 = vsel %vm498, %v1898, %v1910
    %v1922 = vsel %vm498, %v1900, %v1912
    %v1923 = vsel %vm498, %v1902, %v1914
    %v1924 = vsel %vm498, %v1904, %v1916
    %s1925 = sld [smem:[#allocation2 + $0xb]]
    %v1926 = vstv %s1925
    %v1927 = vmul.f32 %v1921, %v1926
    %v1928 = vmul.f32 %v1922, %v1926
    %v1929 = vmul.f32 %v1923, %v1926
    %v1930 = vmul.f32 %v1924, %v1926
    %v1931 = vadd.f32 %v1889, %v1927
    %v1932 = vadd.f32 %v1890, %v1928
    %v1933 = vadd.f32 %v1891, %v1929
    %v1934 = vadd.f32 %v1892, %v1930
    %1935 = vrot.lane.b32.xlu0 %v1879, 100
    %v1936 = vpop.permute.xlu0 %1935
    %1937 = vrot.lane.b32.xlu0 %v1880, 100
    %v1938 = vpop.permute.xlu0 %1937
    %1939 = vrot.lane.b32.xlu0 %v1881, 100
    %v1940 = vpop.permute.xlu0 %1939
    %1941 = vrot.lane.b32.xlu0 %v1882, 100
    %v1942 = vpop.permute.xlu0 %1941
    %1947 = vrot.lane.b32.xlu0 %v1879, 2
    %v1948 = vpop.permute.xlu0 %1947
    %1949 = vrot.lane.b32.xlu0 %v1880, 2
    %v1950 = vpop.permute.xlu0 %1949
    %1951 = vrot.lane.b32.xlu0 %v1881, 2
    %v1952 = vpop.permute.xlu0 %1951
    %1953 = vrot.lane.b32.xlu0 %v1882, 2
    %v1954 = vpop.permute.xlu0 %1953
    %vm1959 = vcmask 15360
    %v1960 = vsel %vm1959, %v1936, %v1948
    %v1961 = vsel %vm1959, %v1938, %v1950
    %v1962 = vsel %vm1959, %v1940, %v1952
    %v1963 = vsel %vm1959, %v1942, %v1954
    %s1964 = sld [smem:[#allocation2 + $0xc]]
    %v1965 = vstv %s1964
    %v1966 = vmul.f32 %v1960, %v1965
    %v1967 = vmul.f32 %v1961, %v1965
    %v1968 = vmul.f32 %v1962, %v1965
    %v1969 = vmul.f32 %v1963, %v1965
    %v1970 = vadd.f32 %v1931, %v1966
    %v1971 = vadd.f32 %v1932, %v1967
    %v1972 = vadd.f32 %v1933, %v1968
    %v1973 = vadd.f32 %v1934, %v1969
    %v1974 = vrot.slane %v1882, 5
    %v1976 = vrot.slane %v1879, 7
    %v1977 = vrot.slane %v1880, 7
    %v1978 = vsel %vm447, %v1976, %v1977
    %v1979 = vrot.slane %v1881, 7
    %v1980 = vsel %vm447, %v1977, %v1979
    %v1981 = vrot.slane %v1882, 7
    %v1982 = vsel %vm447, %v1979, %v1981
    %v1987 = vsel %vm447, %v1974, %v1976
    %s1988 = sld [smem:[#allocation2 + $0xd]]
    %v1989 = vstv %s1988
    %v1990 = vmul.f32 %v1987, %v1989
    %v1991 = vmul.f32 %v1978, %v1989
    %v1992 = vmul.f32 %v1980, %v1989
    %v1993 = vmul.f32 %v1982, %v1989
    %v1994 = vadd.f32 %v1970, %v1990
    %v1995 = vadd.f32 %v1971, %v1991
    %v1996 = vadd.f32 %v1972, %v1992
    %v1997 = vadd.f32 %v1973, %v1993
    %1999 = vrot.lane.b32.xlu0 %v1987, 99
    %v2000 = vpop.permute.xlu0 %1999
    %2001 = vrot.lane.b32.xlu0 %v1978, 99
    %v2002 = vpop.permute.xlu0 %2001
    %2003 = vrot.lane.b32.xlu0 %v1980, 99
    %v2004 = vpop.permute.xlu0 %2003
    %2005 = vrot.lane.b32.xlu0 %v1982, 99
    %v2006 = vpop.permute.xlu0 %2005
    %2011 = vrot.lane.b32.xlu0 %v1987, 1
    %v2012 = vpop.permute.xlu0 %2011
    %2013 = vrot.lane.b32.xlu0 %v1978, 1
    %v2014 = vpop.permute.xlu0 %2013
    %2015 = vrot.lane.b32.xlu0 %v1980, 1
    %v2016 = vpop.permute.xlu0 %2015
    %2017 = vrot.lane.b32.xlu0 %v1982, 1
    %v2018 = vpop.permute.xlu0 %2017
    %v2023 = vsel %vm498, %v2000, %v2012
    %v2024 = vsel %vm498, %v2002, %v2014
    %v2025 = vsel %vm498, %v2004, %v2016
    %v2026 = vsel %vm498, %v2006, %v2018
    %s2027 = sld [smem:[#allocation2 + $0xe]]
    %v2028 = vstv %s2027
    %v2029 = vmul.f32 %v2023, %v2028
    %v2030 = vmul.f32 %v2024, %v2028
    %v2031 = vmul.f32 %v2025, %v2028
    %v2032 = vmul.f32 %v2026, %v2028
    %v2033 = vadd.f32 %v1994, %v2029
    %v2034 = vadd.f32 %v1995, %v2030
    %v2035 = vadd.f32 %v1996, %v2031
    %v2036 = vadd.f32 %v1997, %v2032
    %2037 = vrot.lane.b32.xlu0 %v1987, 100
    %v2038 = vpop.permute.xlu0 %2037
    %2039 = vrot.lane.b32.xlu0 %v1978, 100
    %v2040 = vpop.permute.xlu0 %2039
    %2041 = vrot.lane.b32.xlu0 %v1980, 100
    %v2042 = vpop.permute.xlu0 %2041
    %2043 = vrot.lane.b32.xlu0 %v1982, 100
    %v2044 = vpop.permute.xlu0 %2043
    %2049 = vrot.lane.b32.xlu0 %v1987, 2
    %v2050 = vpop.permute.xlu0 %2049
    %2051 = vrot.lane.b32.xlu0 %v1978, 2
    %v2052 = vpop.permute.xlu0 %2051
    %2053 = vrot.lane.b32.xlu0 %v1980, 2
    %v2054 = vpop.permute.xlu0 %2053
    %2055 = vrot.lane.b32.xlu0 %v1982, 2
    %v2056 = vpop.permute.xlu0 %2055
    %v2061 = vsel %vm1959, %v2038, %v2050
    %v2062 = vsel %vm1959, %v2040, %v2052
    %v2063 = vsel %vm1959, %v2042, %v2054
    %v2064 = vsel %vm1959, %v2044, %v2056
    %s2065 = sld [smem:[#allocation2 + $0xf]]
    %v2066 = vstv %s2065
    %v2067 = vmul.f32 %v2061, %v2066
    %v2068 = vmul.f32 %v2062, %v2066
    %v2069 = vmul.f32 %v2063, %v2066
    %v2070 = vmul.f32 %v2064, %v2066
    %v2071 = vadd.f32 %v2033, %v2067
    %v2072 = vadd.f32 %v2034, %v2068
    %v2073 = vadd.f32 %v2035, %v2069
    %v2074 = vadd.f32 %v2036, %v2070
    %v2075 = vrot.slane %v1882, 4
    %v2077 = vrot.slane %v1879, 6
    %v2078 = vrot.slane %v1880, 6
    %v2079 = vsel %vm1270, %v2077, %v2078
    %v2080 = vrot.slane %v1881, 6
    %v2081 = vsel %vm1270, %v2078, %v2080
    %v2082 = vrot.slane %v1882, 6
    %v2083 = vsel %vm1270, %v2080, %v2082
    %v2088 = vsel %vm1270, %v2075, %v2077
    %s2089 = sld [smem:[#allocation2 + $0x10]]
    %v2090 = vstv %s2089
    %v2091 = vmul.f32 %v2088, %v2090
    %v2092 = vmul.f32 %v2079, %v2090
    %v2093 = vmul.f32 %v2081, %v2090
    %v2094 = vmul.f32 %v2083, %v2090
    %v2095 = vadd.f32 %v2071, %v2091
    %v2096 = vadd.f32 %v2072, %v2092
    %v2097 = vadd.f32 %v2073, %v2093
    %v2098 = vadd.f32 %v2074, %v2094
    %2100 = vrot.lane.b32.xlu0 %v2088, 99
    %v2101 = vpop.permute.xlu0 %2100
    %2102 = vrot.lane.b32.xlu0 %v2079, 99
    %v2103 = vpop.permute.xlu0 %2102
    %2104 = vrot.lane.b32.xlu0 %v2081, 99
    %v2105 = vpop.permute.xlu0 %2104
    %2106 = vrot.lane.b32.xlu0 %v2083, 99
    %v2107 = vpop.permute.xlu0 %2106
    %2112 = vrot.lane.b32.xlu0 %v2088, 1
    %v2113 = vpop.permute.xlu0 %2112
    %2114 = vrot.lane.b32.xlu0 %v2079, 1
    %v2115 = vpop.permute.xlu0 %2114
    %2116 = vrot.lane.b32.xlu0 %v2081, 1
    %v2117 = vpop.permute.xlu0 %2116
    %2118 = vrot.lane.b32.xlu0 %v2083, 1
    %v2119 = vpop.permute.xlu0 %2118
    %v2124 = vsel %vm498, %v2101, %v2113
    %v2125 = vsel %vm498, %v2103, %v2115
    %v2126 = vsel %vm498, %v2105, %v2117
    %v2127 = vsel %vm498, %v2107, %v2119
    %s2128 = sld [smem:[#allocation2 + $0x11]]
    %v2129 = vstv %s2128
    %v2130 = vmul.f32 %v2124, %v2129
    %v2131 = vmul.f32 %v2125, %v2129
    %v2132 = vmul.f32 %v2126, %v2129
    %v2133 = vmul.f32 %v2127, %v2129
    %v2134 = vadd.f32 %v2095, %v2130
    %v2135 = vadd.f32 %v2096, %v2131
    %v2136 = vadd.f32 %v2097, %v2132
    %v2137 = vadd.f32 %v2098, %v2133
    %2138 = vrot.lane.b32.xlu0 %v2088, 100
    %v2139 = vpop.permute.xlu0 %2138
    %2140 = vrot.lane.b32.xlu0 %v2079, 100
    %v2141 = vpop.permute.xlu0 %2140
    %2142 = vrot.lane.b32.xlu0 %v2081, 100
    %v2143 = vpop.permute.xlu0 %2142
    %2144 = vrot.lane.b32.xlu0 %v2083, 100
    %v2145 = vpop.permute.xlu0 %2144
    %2150 = vrot.lane.b32.xlu0 %v2088, 2
    %v2151 = vpop.permute.xlu0 %2150
    %2152 = vrot.lane.b32.xlu0 %v2079, 2
    %v2153 = vpop.permute.xlu0 %2152
    %2154 = vrot.lane.b32.xlu0 %v2081, 2
    %v2155 = vpop.permute.xlu0 %2154
    %2156 = vrot.lane.b32.xlu0 %v2083, 2
    %v2157 = vpop.permute.xlu0 %2156
    %v2162 = vsel %vm1959, %v2139, %v2151
    %v2163 = vsel %vm1959, %v2141, %v2153
    %v2164 = vsel %vm1959, %v2143, %v2155
    %v2165 = vsel %vm1959, %v2145, %v2157
    %s2166 = sld [smem:[#allocation2 + $0x12]]
    %v2167 = vstv %s2166
    %v2168 = vmul.f32 %v2162, %v2167
    %v2169 = vmul.f32 %v2163, %v2167
    %v2170 = vmul.f32 %v2164, %v2167
    %v2171 = vmul.f32 %v2165, %v2167
    %v2172 = vadd.f32 %v2134, %v2168
    %v2173 = vadd.f32 %v2135, %v2169
    %v2174 = vadd.f32 %v2136, %v2170
    %v2175 = vadd.f32 %v2137, %v2171
    %s2176 = sld [smem:[#allocation2 + $0x13]]
    %v2177 = vstv %s2176
    %v2178 = vadd.f32 %v2172, %v2177
    %v2179 = vadd.f32 %v2173, %v2177
    %v2180 = vadd.f32 %v2174, %v2177
    %v2181 = vadd.f32 %v2175, %v2177
    %2182 = vst.msk [vmem:[%s10] sm:$0xff] %vm739, %v2178
    %2183 = vst.msk [vmem:[%s10 + $0x8] sm:$0xff] %vm739, %v2179
    %2184 = vst.msk [vmem:[%s10 + $0x10] sm:$0xff] %vm739, %v2180
    %vm2185 = vcmask 242688
    %2186 = vst.msk [vmem:[%s10 + $0x18] sm:$0x3f] %vm2185, %v2181
    // Predicated region
    $region46: #{pixel_encoder_forward.1} parent=1 // pred_check
      _
    $region47: #{pixel_encoder_forward.1} parent=1 // pred_check_branch
      %2188 = sbr.rel (0) target = $region49
    $region48: #{pixel_encoder_forward.1} parent=1 // pred_region
      _
    $region49: #{pixel_encoder_forward.1} parent=1 // pred_fallthru
      _
    // Predicated region
    $region50: #{pixel_encoder_forward.1} parent=1 // pred_check
      _
    $region51: #{pixel_encoder_forward.1} parent=1 // pred_check_branch
      %2190 = sbr.rel (0) target = $region53
    $region52: #{pixel_encoder_forward.1} parent=1 // pred_region
      _
    $region53: #{pixel_encoder_forward.1} parent=1 // pred_fallthru
      _
    %2191 = vsyncpa [#allocation3], 1

</llo_original>
